<compile_context>
chip_gen: v7x
topology: tpu7x:2x2x1
jax: 0.10.0
libtpu: 0.0.40
codegen_flags: <defaults>
</compile_context>

<pallas_src>
import functools

import jax
import jax.numpy as jnp
from jax.experimental import pallas as pl
from jax.experimental.pallas import tpu as pltpu

KERNEL_SIZE = 7
_INV_SQRT2 = 0.7071067811865476
_LANE = 128


def _round_up(n, m):
    return -(-n // m) * m


def convnext_v2_block_kernel(
    x_ref, cvec_ref, ivec_ref, w1_ref, w2_ref, out_ref, xp_ref,
    *, seq_len, pad, dilation, c_real, i_real, bb,
):
    T = seq_len
    Cp = x_ref.shape[-1]
    Ip = w1_ref.shape[-1]

    cvec = cvec_ref[...]                      # (11, Cp) f32: dw_w[0..6], dw_b, ln_w, ln_b, b2
    ivec = ivec_ref[...]                      # (3,  Ip) f32: b1, gamma, beta

    # Stage the activation with a zero halo along T in a small VMEM scratch.
    # Halos are only 2*pad rows -> zeroing them every step is negligible (and
    # stays correct when the grid is split across TensorCores).
    if pad > 0:
        zhalo = jnp.zeros((bb, pad, Cp), jnp.float32)
        xp_ref[:, :pad, :] = zhalo
        xp_ref[:, pad + T:, :] = zhalo
    xp_ref[:, pad:pad + T, :] = x_ref[...].astype(jnp.float32)

    # ---- depthwise Conv1d along T (kernel 7, groups = dim), f32 accumulate ----
    # Taps are read straight from the staging ref (no full padded value +
    # per-tap relayout slices).
    acc = jnp.zeros((bb, T, Cp), jnp.float32)
    for k in range(KERNEL_SIZE):              # static unrolled taps
        off = k * dilation
        w_k = cvec[k:k + 1, :].reshape(1, 1, Cp)
        acc = acc + xp_ref[:, off:off + T, :] * w_k
    y = acc + cvec[7:8, :].reshape(1, 1, Cp)  # + dwconv bias

    # ---- LayerNorm over the *real* channels (eps=1e-6, biased variance) ----
    # Padded lanes of y are exactly zero, so lane-sums / c_real reproduce the
    # un-padded statistics.
    inv_c = 1.0 / c_real
    mean = jnp.sum(y, axis=-1, keepdims=True) * inv_c
    meansq = jnp.sum(y * y, axis=-1, keepdims=True) * inv_c
    var = meansq - mean * mean
    y = (y - mean) * jax.lax.rsqrt(var + 1e-6)
    y = y * cvec[8:9, :].reshape(1, 1, Cp) + cvec[9:10, :].reshape(1, 1, Cp)

    # ---- pwconv1 (dim -> intermediate_dim): bf16 operands, f32 accumulate ----
    y2d = y.reshape(bb * T, Cp).astype(jnp.bfloat16)
    h = jnp.dot(y2d, w1_ref[...], preferred_element_type=jnp.float32)
    h = h + ivec[0:1, :]                      # b1
    # exact (erf) GELU to match torch nn.GELU()
    h = 0.5 * h * (1.0 + jax.lax.erf(h * _INV_SQRT2))

    # ---- GRN (L2 norm over T per channel, per batch row) ----
    h3 = h.reshape(bb, T, Ip)
    gx = jnp.sqrt(jnp.sum(h3 * h3, axis=1, keepdims=True))     # f32 reduction
    h_bf = h3.astype(jnp.bfloat16)            # drop f32 h; keep bf16 to the MXU
    gmean = jnp.sum(gx, axis=-1, keepdims=True) * (1.0 / i_real)
    nx = gx * pl.reciprocal(gmean + 1e-6, approx=True)
    # gamma*(h*nx) + beta + h  ==  h*(gamma*nx + 1) + beta
    scale = (ivec[1:2, :].reshape(1, 1, Ip) * nx + 1.0).astype(jnp.bfloat16)
    beta = ivec[2:3, :].reshape(1, 1, Ip).astype(jnp.bfloat16)
    h_bf = h_bf * scale + beta

    # ---- pwconv2 (intermediate_dim -> dim) + bias + residual ----
    h2d = h_bf.reshape(bb * T, Ip)
    out = jnp.dot(h2d, w2_ref[...], preferred_element_type=jnp.float32)
    out = out.reshape(bb, T, Cp) + cvec[10:11, :].reshape(1, 1, Cp)
    # Re-read the input block for the residual (keeps the f32 copy's live range
    # short instead of holding it across both matmuls).
    out_ref[...] = (out + x_ref[...].astype(jnp.float32)).astype(out_ref.dtype)


def convnext_v2_block(x, params, *, dilation=1, max_rows=None):
    B, T, C = x.shape
    I = params["w1"].shape[1]
    pad = dilation * (KERNEL_SIZE - 1) // 2

    # Lane-dense padding of both channel axes (zeros; semantics preserved
    # because kernel reductions divide by the real C / I).  No-op if already
    # multiples of 128.
    Cp = _round_up(C, _LANE)
    Ip = _round_up(I, _LANE)

    def pad_last(a, tgt):
        d = tgt - a.shape[-1]
        return a if d == 0 else jnp.pad(a, [(0, 0)] * (a.ndim - 1) + [(0, d)])

    xP = pad_last(x, Cp)

    cvec = jnp.concatenate(
        [pad_last(params["dw_w"], Cp),     # rows 0..6
         pad_last(params["dw_b"], Cp),     # row 7
         pad_last(params["ln_w"], Cp),     # row 8
         pad_last(params["ln_b"], Cp),     # row 9
         pad_last(params["b2"], Cp)],      # row 10
        axis=0).astype(jnp.float32)
    ivec = jnp.concatenate(
        [pad_last(params["b1"], Ip),       # row 0
         pad_last(params["gamma"], Ip),    # row 1
         pad_last(params["beta"], Ip)],    # row 2
        axis=0).astype(jnp.float32)

    w1 = jnp.pad(params["w1"], ((0, Cp - C), (0, Ip - I))).astype(jnp.bfloat16)
    w2 = jnp.pad(params["w2"], ((0, Ip - I), (0, Cp - C))).astype(jnp.bfloat16)

    # ---- generation-aware VMEM budget and M-tile (bb*T rows) sizing ----
    try:
        vmem_cap = int(pltpu.get_tpu_info().vmem_capacity_bytes)
    except Exception:
        vmem_cap = 64 * 1024 * 1024                       # v7x-sized conservative default
    vmem_limit = min((vmem_cap * 3) // 4, 112 * 1024 * 1024)

    xb = jnp.dtype(x.dtype).itemsize
    # single-buffered weights + packed vectors
    weight_bytes = 2 * Cp * Ip * 2 + (11 * Cp + 3 * Ip) * 4
    # in/out blocks (double-buffered) + f32 staging/conv/out temps + f32+bf16 h
    per_row = (((4 * xb + 12) * Cp + 6 * Ip) * 5) // 4    # 25% slack
    rows_cap = max(T, (vmem_limit - weight_bytes) // max(per_row, 1))
    if max_rows is not None:
        rows_cap = min(rows_cap, max_rows)
    rows_cap = min(rows_cap, 2048)

    bb_max = min(B, max(1, rows_cap // T))
    if T % 8 != 0:
        bb_max = 1            # keep the (bb*T, Cp) reshape (8,128)-tile aligned
    if B >= 2:
        bb_max = min(bb_max, B // 2)   # grid >= 2 so both TensorCores get work
    bb = max(d for d in range(1, bb_max + 1) if B % d == 0)
    grid = (B // bb,)

    kernel = functools.partial(
        convnext_v2_block_kernel, seq_len=T, pad=pad, dilation=dilation,
        c_real=float(C), i_real=float(I), bb=bb)

    cost = pl.CostEstimate(
        flops=int(4 * B * T * Cp * Ip + (2 * KERNEL_SIZE + 16) * B * T * Cp),
        transcendentals=int(B * T * Ip),
        bytes_accessed=int(2 * B * T * Cp * xb + 2 * Cp * Ip * 2
                           + (11 * Cp + 3 * Ip) * 4),
    )

    def call(single_buffer_consts):
        # Constant-index operands: double-buffering them only wastes VMEM.
        const_kw = (
            dict(pipeline_mode=pl.Buffered(1)) if single_buffer_consts else {})
        in_specs = [
            pl.BlockSpec((bb, T, Cp), lambda b: (b, 0, 0)),            # activations
            pl.BlockSpec((11, Cp), lambda b: (0, 0), **const_kw),      # packed C-side vectors
            pl.BlockSpec((3, Ip), lambda b: (0, 0), **const_kw),       # packed I-side vectors
            pl.BlockSpec((Cp, Ip), lambda b: (0, 0), **const_kw),      # pwconv1 weight (bf16)
            pl.BlockSpec((Ip, Cp), lambda b: (0, 0), **const_kw),      # pwconv2 weight (bf16)
        ]
        return pl.pallas_call(
            kernel,
            out_shape=jax.ShapeDtypeStruct((B, T, Cp), x.dtype),
            grid=grid,
            in_specs=in_specs,
            out_specs=pl.BlockSpec((bb, T, Cp), lambda b: (b, 0, 0)),
            scratch_shapes=[pltpu.VMEM((bb, T + 2 * pad, Cp), jnp.float32)],
            compiler_params=pltpu.CompilerParams(
                dimension_semantics=("parallel",),
                vmem_limit_bytes=int(vmem_limit)),
            cost_estimate=cost,
        )(xP, cvec, ivec, w1, w2)

    try:
        out = jax.block_until_ready(call(True))
    except Exception:
        out = call(False)     # fallback: default double-buffering of constants

    return out if Cp == C else out[:, :, :C]


def ref_convnext_v2_block(x, p, *, dilation=1):
    """Pure-JAX f32 reference mirroring the PyTorch forward (channels-last)."""
    B, T, C = x.shape
    pad = dilation * (KERNEL_SIZE - 1) // 2
    xp = jnp.pad(x, ((0, 0), (pad, pad), (0, 0)))
    y = jnp.zeros_like(x)
    for k in range(KERNEL_SIZE):
        off = k * dilation
        y = y + xp[:, off:off + T, :] * p["dw_w"][k][None, None, :]
    y = y + p["dw_b"]
    mean = jnp.mean(y, axis=-1, keepdims=True)
    var = jnp.mean((y - mean) ** 2, axis=-1, keepdims=True)
    y = (y - mean) / jnp.sqrt(var + 1e-6)
    y = y * p["ln_w"] + p["ln_b"]
    h = jnp.einsum("btc,ci->bti", y, p["w1"],
                   precision=jax.lax.Precision.HIGHEST) + p["b1"]
    h = 0.5 * h * (1.0 + jax.lax.erf(h * _INV_SQRT2))
    gx = jnp.sqrt(jnp.sum(h * h, axis=1, keepdims=True))            # norm over T
    nx = gx / (jnp.mean(gx, axis=-1, keepdims=True) + 1e-6)
    h = p["gamma"] * (h * nx) + p["beta"] + h
    out = jnp.einsum("bti,ic->btc", h, p["w2"],
                     precision=jax.lax.Precision.HIGHEST) + p["b2"]
    return x + out


if __name__ == "__main__":
    B, T, DIM, INTER = 2, 16, 32, 64
    dilation = 1

    key = jax.random.PRNGKey(0)
    ks = jax.random.split(key, 12)
    f32 = jnp.float32

    params = {
        # torch Conv1d weight is (dim, 1, 7); stored here as (7, dim)
        "dw_w":  0.1 * jax.random.normal(ks[0], (KERNEL_SIZE, DIM), f32),
        "dw_b":  0.1 * jax.random.normal(ks[1], (1, DIM), f32),
        "ln_w":  1.0 + 0.05 * jax.random.normal(ks[2], (1, DIM), f32),
        "ln_b":  0.05 * jax.random.normal(ks[3], (1, DIM), f32),
        # torch Linear weight is (out, in); stored transposed as (in, out)
        "w1":    0.1 * jax.random.normal(ks[4], (DIM, INTER), f32),
        "b1":    0.1 * jax.random.normal(ks[5], (1, INTER), f32),
        # torch inits gamma/beta to zero; use nonzero values to exercise GRN
        "gamma": 0.1 * jax.random.normal(ks[6], (1, INTER), f32),
        "beta":  0.1 * jax.random.normal(ks[7], (1, INTER), f32),
        "w2":    0.1 * jax.random.normal(ks[8], (INTER, DIM), f32),
        "b2":    0.1 * jax.random.normal(ks[9], (1, DIM), f32),
    }

    x = jax.random.normal(ks[10], (B, T, DIM), f32)

    out = convnext_v2_block(x, params, dilation=dilation)
    out = jax.block_until_ready(out)

    ref = jax.block_until_ready(ref_convnext_v2_block(x, params, dilation=dilation))
    assert out.shape == (B, T, DIM)
    # bf16 matmul operands + bf16 GRN epilogue (f32 accumulation everywhere)
    # -> loosened tolerance vs the f32 reference.
    assert jnp.allclose(out, ref, rtol=2e-2, atol=2e-2), (
        float(jnp.max(jnp.abs(out - ref)))
    )

    print("KERNEL_OK")
</pallas_src>

<mosaic_0001>
module attributes {stable_mosaic.version = 11 : i64} {
  func.func @convnext_v2_block_kernel(%arg0: i32, %arg1: memref<1x16x128xf32, #tpu.memory_space<vmem>>, %arg2: memref<11x128xf32, #tpu.memory_space<vmem>>, %arg3: memref<3x128xf32, #tpu.memory_space<vmem>>, %arg4: memref<128x128xbf16, #tpu.memory_space<vmem>>, %arg5: memref<128x128xbf16, #tpu.memory_space<vmem>>, %arg6: memref<1x16x128xf32, #tpu.memory_space<vmem>>, %arg7: memref<1x22x128xf32, #tpu.memory_space<vmem>>) attributes {dimension_semantics = [#tpu.dimension_semantics<parallel>], iteration_bounds = array<i64: 2>, scalar_prefetch = 0 : i64, scratch_operands = 1 : i64, tpu.core_type = #tpu.core_type<tc>, window_params = [{transform_indices = @transform_0, window_bounds = array<i64: 1, 16, 128>}, {pipeline_mode = #tpu.pipeline_mode<synchronous>, transform_indices = @transform_1, window_bounds = array<i64: 11, 128>}, {pipeline_mode = #tpu.pipeline_mode<synchronous>, transform_indices = @transform_2, window_bounds = array<i64: 3, 128>}, {pipeline_mode = #tpu.pipeline_mode<synchronous>, transform_indices = @transform_3, window_bounds = array<i64: 128, 128>}, {pipeline_mode = #tpu.pipeline_mode<synchronous>, transform_indices = @transform_4, window_bounds = array<i64: 128, 128>}, {transform_indices = @transform_5, window_bounds = array<i64: 1, 16, 128>}]} {
    %c0 = arith.constant 0 : index
    %c0_0 = arith.constant 0 : index
    %0 = vector.load %arg2[%c0, %c0_0] : memref<11x128xf32, #tpu.memory_space<vmem>>, vector<11x128xf32>
    %c0_1 = arith.constant 0 : index
    %c0_2 = arith.constant 0 : index
    %1 = vector.load %arg3[%c0_1, %c0_2] : memref<3x128xf32, #tpu.memory_space<vmem>>, vector<3x128xf32>
    %cst = arith.constant 0.000000e+00 : f32
    %2 = vector.broadcast %cst : f32 to vector<1x3x128xf32>
    %c0_3 = arith.constant 0 : index
    %c0_4 = arith.constant 0 : index
    %c0_5 = arith.constant 0 : index
    %3 = vector.load %arg7[%c0_3, %c0_4, %c0_5] : memref<1x22x128xf32, #tpu.memory_space<vmem>>, vector<1x3x128xf32>
    tpu.vector_store %arg7[%c0_3, %c0_4, %c0_5], %2 {strides = array<i32>} : memref<1x22x128xf32, #tpu.memory_space<vmem>>, vector<1x3x128xf32>,
    %c0_6 = arith.constant 0 : index
    %c19 = arith.constant 19 : index
    %c0_7 = arith.constant 0 : index
    %4 = vector.load %arg7[%c0_6, %c19, %c0_7] : memref<1x22x128xf32, #tpu.memory_space<vmem>>, vector<1x3x128xf32>
    tpu.vector_store %arg7[%c0_6, %c19, %c0_7], %2 {strides = array<i32>} : memref<1x22x128xf32, #tpu.memory_space<vmem>>, vector<1x3x128xf32>,
    %c0_8 = arith.constant 0 : index
    %c0_9 = arith.constant 0 : index
    %c0_10 = arith.constant 0 : index
    %5 = vector.load %arg1[%c0_8, %c0_9, %c0_10] : memref<1x16x128xf32, #tpu.memory_space<vmem>>, vector<1x16x128xf32>
    %c0_11 = arith.constant 0 : index
    %c3 = arith.constant 3 : index
    %c0_12 = arith.constant 0 : index
    %6 = vector.load %arg7[%c0_11, %c3, %c0_12] : memref<1x22x128xf32, #tpu.memory_space<vmem>>, vector<1x16x128xf32>
    tpu.vector_store %arg7[%c0_11, %c3, %c0_12], %5 {strides = array<i32>} : memref<1x22x128xf32, #tpu.memory_space<vmem>>, vector<1x16x128xf32>,
    %cst_13 = arith.constant 0.000000e+00 : f32
    %7 = vector.broadcast %cst_13 : f32 to vector<1x16x128xf32>
    %8 = vector.extract_strided_slice %0 {offsets = [0, 0], sizes = [1, 128], strides = [1, 1]} : vector<11x128xf32> to vector<1x128xf32>
    %9 = vector.shape_cast %8 : vector<1x128xf32> to vector<1x1x128xf32>
    %c0_14 = arith.constant 0 : index
    %c0_15 = arith.constant 0 : index
    %c0_16 = arith.constant 0 : index
    %10 = vector.load %arg7[%c0_14, %c0_15, %c0_16] : memref<1x22x128xf32, #tpu.memory_space<vmem>>, vector<1x16x128xf32>
    %11 = vector.broadcast %9 : vector<1x1x128xf32> to vector<1x16x128xf32>
    %12 = arith.mulf %10, %11 : vector<1x16x128xf32>
    %13 = arith.addf %7, %12 : vector<1x16x128xf32>
    %14 = vector.extract_strided_slice %0 {offsets = [1, 0], sizes = [1, 128], strides = [1, 1]} : vector<11x128xf32> to vector<1x128xf32>
    %15 = vector.shape_cast %14 : vector<1x128xf32> to vector<1x1x128xf32>
    %c0_17 = arith.constant 0 : index
    %c1 = arith.constant 1 : index
    %c0_18 = arith.constant 0 : index
    %16 = vector.load %arg7[%c0_17, %c1, %c0_18] : memref<1x22x128xf32, #tpu.memory_space<vmem>>, vector<1x16x128xf32>
    %17 = vector.broadcast %15 : vector<1x1x128xf32> to vector<1x16x128xf32>
    %18 = arith.mulf %16, %17 : vector<1x16x128xf32>
    %19 = arith.addf %13, %18 : vector<1x16x128xf32>
    %20 = vector.extract_strided_slice %0 {offsets = [2, 0], sizes = [1, 128], strides = [1, 1]} : vector<11x128xf32> to vector<1x128xf32>
    %21 = vector.shape_cast %20 : vector<1x128xf32> to vector<1x1x128xf32>
    %c0_19 = arith.constant 0 : index
    %c2 = arith.constant 2 : index
    %c0_20 = arith.constant 0 : index
    %22 = vector.load %arg7[%c0_19, %c2, %c0_20] : memref<1x22x128xf32, #tpu.memory_space<vmem>>, vector<1x16x128xf32>
    %23 = vector.broadcast %21 : vector<1x1x128xf32> to vector<1x16x128xf32>
    %24 = arith.mulf %22, %23 : vector<1x16x128xf32>
    %25 = arith.addf %19, %24 : vector<1x16x128xf32>
    %26 = vector.extract_strided_slice %0 {offsets = [3, 0], sizes = [1, 128], strides = [1, 1]} : vector<11x128xf32> to vector<1x128xf32>
    %27 = vector.shape_cast %26 : vector<1x128xf32> to vector<1x1x128xf32>
    %c0_21 = arith.constant 0 : index
    %c3_22 = arith.constant 3 : index
    %c0_23 = arith.constant 0 : index
    %28 = vector.load %arg7[%c0_21, %c3_22, %c0_23] : memref<1x22x128xf32, #tpu.memory_space<vmem>>, vector<1x16x128xf32>
    %29 = vector.broadcast %27 : vector<1x1x128xf32> to vector<1x16x128xf32>
    %30 = arith.mulf %28, %29 : vector<1x16x128xf32>
    %31 = arith.addf %25, %30 : vector<1x16x128xf32>
    %32 = vector.extract_strided_slice %0 {offsets = [4, 0], sizes = [1, 128], strides = [1, 1]} : vector<11x128xf32> to vector<1x128xf32>
    %33 = vector.shape_cast %32 : vector<1x128xf32> to vector<1x1x128xf32>
    %c0_24 = arith.constant 0 : index
    %c4 = arith.constant 4 : index
    %c0_25 = arith.constant 0 : index
    %34 = vector.load %arg7[%c0_24, %c4, %c0_25] : memref<1x22x128xf32, #tpu.memory_space<vmem>>, vector<1x16x128xf32>
    %35 = vector.broadcast %33 : vector<1x1x128xf32> to vector<1x16x128xf32>
    %36 = arith.mulf %34, %35 : vector<1x16x128xf32>
    %37 = arith.addf %31, %36 : vector<1x16x128xf32>
    %38 = vector.extract_strided_slice %0 {offsets = [5, 0], sizes = [1, 128], strides = [1, 1]} : vector<11x128xf32> to vector<1x128xf32>
    %39 = vector.shape_cast %38 : vector<1x128xf32> to vector<1x1x128xf32>
    %c0_26 = arith.constant 0 : index
    %c5 = arith.constant 5 : index
    %c0_27 = arith.constant 0 : index
    %40 = vector.load %arg7[%c0_26, %c5, %c0_27] : memref<1x22x128xf32, #tpu.memory_space<vmem>>, vector<1x16x128xf32>
    %41 = vector.broadcast %39 : vector<1x1x128xf32> to vector<1x16x128xf32>
    %42 = arith.mulf %40, %41 : vector<1x16x128xf32>
    %43 = arith.addf %37, %42 : vector<1x16x128xf32>
    %44 = vector.extract_strided_slice %0 {offsets = [6, 0], sizes = [1, 128], strides = [1, 1]} : vector<11x128xf32> to vector<1x128xf32>
    %45 = vector.shape_cast %44 : vector<1x128xf32> to vector<1x1x128xf32>
    %c0_28 = arith.constant 0 : index
    %c6 = arith.constant 6 : index
    %c0_29 = arith.constant 0 : index
    %46 = vector.load %arg7[%c0_28, %c6, %c0_29] : memref<1x22x128xf32, #tpu.memory_space<vmem>>, vector<1x16x128xf32>
    %47 = vector.broadcast %45 : vector<1x1x128xf32> to vector<1x16x128xf32>
    %48 = arith.mulf %46, %47 : vector<1x16x128xf32>
    %49 = arith.addf %43, %48 : vector<1x16x128xf32>
    %50 = vector.extract_strided_slice %0 {offsets = [7, 0], sizes = [1, 128], strides = [1, 1]} : vector<11x128xf32> to vector<1x128xf32>
    %51 = vector.shape_cast %50 : vector<1x128xf32> to vector<1x1x128xf32>
    %52 = vector.broadcast %51 : vector<1x1x128xf32> to vector<1x16x128xf32>
    %53 = arith.addf %49, %52 : vector<1x16x128xf32>
    %cst_30 = arith.constant dense<0.000000e+00> : vector<1x16xf32>
    %54 = vector.multi_reduction <add>, %53, %cst_30 [2] : vector<1x16x128xf32> to vector<1x16xf32>
    %55 = vector.shape_cast %54 : vector<1x16xf32> to vector<1x16x1xf32>
    %cst_31 = arith.constant 3.125000e-02 : f32
    %56 = vector.broadcast %cst_31 : f32 to vector<1x16x1xf32>
    %57 = arith.mulf %55, %56 : vector<1x16x1xf32>
    %58 = arith.mulf %53, %53 : vector<1x16x128xf32>
    %cst_32 = arith.constant dense<0.000000e+00> : vector<1x16xf32>
    %59 = vector.multi_reduction <add>, %58, %cst_32 [2] : vector<1x16x128xf32> to vector<1x16xf32>
    %60 = vector.shape_cast %59 : vector<1x16xf32> to vector<1x16x1xf32>
    %cst_33 = arith.constant 3.125000e-02 : f32
    %61 = vector.broadcast %cst_33 : f32 to vector<1x16x1xf32>
    %62 = arith.mulf %60, %61 : vector<1x16x1xf32>
    %63 = arith.mulf %57, %57 : vector<1x16x1xf32>
    %64 = arith.subf %62, %63 : vector<1x16x1xf32>
    %65 = vector.broadcast %57 : vector<1x16x1xf32> to vector<1x16x128xf32>
    %66 = arith.subf %53, %65 : vector<1x16x128xf32>
    %cst_34 = arith.constant 9.99999997E-7 : f32
    %67 = vector.broadcast %cst_34 : f32 to vector<1x16x1xf32>
    %68 = arith.addf %64, %67 : vector<1x16x1xf32>
    %69 = math.rsqrt %68 : vector<1x16x1xf32>
    %70 = vector.broadcast %69 : vector<1x16x1xf32> to vector<1x16x128xf32>
    %71 = arith.mulf %66, %70 : vector<1x16x128xf32>
    %72 = vector.extract_strided_slice %0 {offsets = [8, 0], sizes = [1, 128], strides = [1, 1]} : vector<11x128xf32> to vector<1x128xf32>
    %73 = vector.shape_cast %72 : vector<1x128xf32> to vector<1x1x128xf32>
    %74 = vector.broadcast %73 : vector<1x1x128xf32> to vector<1x16x128xf32>
    %75 = arith.mulf %71, %74 : vector<1x16x128xf32>
    %76 = vector.extract_strided_slice %0 {offsets = [9, 0], sizes = [1, 128], strides = [1, 1]} : vector<11x128xf32> to vector<1x128xf32>
    %77 = vector.shape_cast %76 : vector<1x128xf32> to vector<1x1x128xf32>
    %78 = vector.broadcast %77 : vector<1x1x128xf32> to vector<1x16x128xf32>
    %79 = arith.addf %75, %78 : vector<1x16x128xf32>
    %80 = vector.shape_cast %79 : vector<1x16x128xf32> to vector<16x128xf32>
    %81 = arith.truncf %80 : vector<16x128xf32> to vector<16x128xbf16>
    %c0_35 = arith.constant 0 : index
    %c0_36 = arith.constant 0 : index
    %82 = vector.load %arg4[%c0_35, %c0_36] : memref<128x128xbf16, #tpu.memory_space<vmem>>, vector<128x128xbf16>
    %cst_37 = arith.constant dense<0.000000e+00> : vector<16x128xf32>
    %83 = tpu.matmul %81, %82, %cst_37 {dimension_numbers = #tpu.dot_dimension_numbers<[1], [0], [0], [1], [0, 0, 1, 1], [], []>} : vector<16x128xbf16>, vector<128x128xbf16>, vector<16x128xf32> -> vector<16x128xf32>
    %84 = vector.extract_strided_slice %1 {offsets = [0, 0], sizes = [1, 128], strides = [1, 1]} : vector<3x128xf32> to vector<1x128xf32>
    %85 = vector.broadcast %84 : vector<1x128xf32> to vector<16x128xf32>
    %86 = arith.addf %83, %85 : vector<16x128xf32>
    %cst_38 = arith.constant 5.000000e-01 : f32
    %87 = vector.broadcast %cst_38 : f32 to vector<16x128xf32>
    %88 = arith.mulf %87, %86 : vector<16x128xf32>
    %cst_39 = arith.constant 0.707106769 : f32
    %89 = vector.broadcast %cst_39 : f32 to vector<16x128xf32>
    %90 = arith.mulf %86, %89 : vector<16x128xf32>
    %91 = math.erf %90 : vector<16x128xf32>
    %cst_40 = arith.constant 1.000000e+00 : f32
    %92 = vector.broadcast %cst_40 : f32 to vector<16x128xf32>
    %93 = arith.addf %92, %91 : vector<16x128xf32>
    %94 = arith.mulf %88, %93 : vector<16x128xf32>
    %95 = vector.shape_cast %94 : vector<16x128xf32> to vector<1x16x128xf32>
    %96 = arith.mulf %95, %95 : vector<1x16x128xf32>
    %cst_41 = arith.constant dense<0.000000e+00> : vector<1x128xf32>
    %97 = vector.multi_reduction <add>, %96, %cst_41 [1] : vector<1x16x128xf32> to vector<1x128xf32>
    %98 = vector.shape_cast %97 : vector<1x128xf32> to vector<1x1x128xf32>
    %99 = math.sqrt %98 : vector<1x1x128xf32>
    %100 = arith.truncf %95 : vector<1x16x128xf32> to vector<1x16x128xbf16>
    %cst_42 = arith.constant dense<0.000000e+00> : vector<1x1xf32>
    %101 = vector.multi_reduction <add>, %99, %cst_42 [2] : vector<1x1x128xf32> to vector<1x1xf32>
    %102 = vector.shape_cast %101 : vector<1x1xf32> to vector<1x1x1xf32>
    %cst_43 = arith.constant 1.562500e-02 : f32
    %103 = vector.broadcast %cst_43 : f32 to vector<1x1x1xf32>
    %104 = arith.mulf %102, %103 : vector<1x1x1xf32>
    %cst_44 = arith.constant 9.99999997E-7 : f32
    %105 = vector.broadcast %cst_44 : f32 to vector<1x1x1xf32>
    %106 = arith.addf %104, %105 : vector<1x1x1xf32>
    %107 = tpu.reciprocal %106 {approx = true} : vector<1x1x1xf32> -> vector<1x1x1xf32>
    %108 = vector.broadcast %107 : vector<1x1x1xf32> to vector<1x1x128xf32>
    %109 = arith.mulf %99, %108 : vector<1x1x128xf32>
    %110 = vector.extract_strided_slice %1 {offsets = [1, 0], sizes = [1, 128], strides = [1, 1]} : vector<3x128xf32> to vector<1x128xf32>
    %111 = vector.shape_cast %110 : vector<1x128xf32> to vector<1x1x128xf32>
    %112 = arith.mulf %111, %109 : vector<1x1x128xf32>
    %cst_45 = arith.constant 1.000000e+00 : f32
    %113 = vector.broadcast %cst_45 : f32 to vector<1x1x128xf32>
    %114 = arith.addf %112, %113 : vector<1x1x128xf32>
    %115 = arith.truncf %114 : vector<1x1x128xf32> to vector<1x1x128xbf16>
    %116 = vector.extract_strided_slice %1 {offsets = [2, 0], sizes = [1, 128], strides = [1, 1]} : vector<3x128xf32> to vector<1x128xf32>
    %117 = vector.shape_cast %116 : vector<1x128xf32> to vector<1x1x128xf32>
    %118 = arith.truncf %117 : vector<1x1x128xf32> to vector<1x1x128xbf16>
    %119 = vector.broadcast %115 : vector<1x1x128xbf16> to vector<1x16x128xbf16>
    %120 = arith.mulf %100, %119 : vector<1x16x128xbf16>
    %121 = vector.broadcast %118 : vector<1x1x128xbf16> to vector<1x16x128xbf16>
    %122 = arith.addf %120, %121 : vector<1x16x128xbf16>
    %123 = vector.shape_cast %122 : vector<1x16x128xbf16> to vector<16x128xbf16>
    %c0_46 = arith.constant 0 : index
    %c0_47 = arith.constant 0 : index
    %124 = vector.load %arg5[%c0_46, %c0_47] : memref<128x128xbf16, #tpu.memory_space<vmem>>, vector<128x128xbf16>
    %cst_48 = arith.constant dense<0.000000e+00> : vector<16x128xf32>
    %125 = tpu.matmul %123, %124, %cst_48 {dimension_numbers = #tpu.dot_dimension_numbers<[1], [0], [0], [1], [0, 0, 1, 1], [], []>} : vector<16x128xbf16>, vector<128x128xbf16>, vector<16x128xf32> -> vector<16x128xf32>
    %126 = vector.shape_cast %125 : vector<16x128xf32> to vector<1x16x128xf32>
    %127 = vector.extract_strided_slice %0 {offsets = [10, 0], sizes = [1, 128], strides = [1, 1]} : vector<11x128xf32> to vector<1x128xf32>
    %128 = vector.shape_cast %127 : vector<1x128xf32> to vector<1x1x128xf32>
    %129 = vector.broadcast %128 : vector<1x1x128xf32> to vector<1x16x128xf32>
    %130 = arith.addf %126, %129 : vector<1x16x128xf32>
    %c0_49 = arith.constant 0 : index
    %c0_50 = arith.constant 0 : index
    %c0_51 = arith.constant 0 : index
    %131 = vector.load %arg1[%c0_49, %c0_50, %c0_51] : memref<1x16x128xf32, #tpu.memory_space<vmem>>, vector<1x16x128xf32>
    %132 = arith.addf %130, %131 : vector<1x16x128xf32>
    %c0_52 = arith.constant 0 : index
    %c0_53 = arith.constant 0 : index
    %c0_54 = arith.constant 0 : index
    %133 = vector.load %arg6[%c0_52, %c0_53, %c0_54] : memref<1x16x128xf32, #tpu.memory_space<vmem>>, vector<1x16x128xf32>
    tpu.vector_store %arg6[%c0_52, %c0_53, %c0_54], %132 {strides = array<i32>} : memref<1x16x128xf32, #tpu.memory_space<vmem>>, vector<1x16x128xf32>,
    return
  }
  func.func @transform_0(%arg0: i32) -> (i32, i32, i32) {
    %c0_i32 = arith.constant 0 : i32
    %c0_i32_0 = arith.constant 0 : i32
    %c0_i32_1 = arith.constant 0 : i32
    return %arg0, %c0_i32, %c0_i32_0 : i32, i32, i32
  }
  func.func @transform_1(%arg0: i32) -> (i32, i32) {
    %c0_i32 = arith.constant 0 : i32
    %c0_i32_0 = arith.constant 0 : i32
    %c0_i32_1 = arith.constant 0 : i32
    return %c0_i32, %c0_i32_0 : i32, i32
  }
  func.func @transform_2(%arg0: i32) -> (i32, i32) {
    %c0_i32 = arith.constant 0 : i32
    %c0_i32_0 = arith.constant 0 : i32
    %c0_i32_1 = arith.constant 0 : i32
    return %c0_i32, %c0_i32_0 : i32, i32
  }
  func.func @transform_3(%arg0: i32) -> (i32, i32) {
    %c0_i32 = arith.constant 0 : i32
    %c0_i32_0 = arith.constant 0 : i32
    %c0_i32_1 = arith.constant 0 : i32
    return %c0_i32, %c0_i32_0 : i32, i32
  }
  func.func @transform_4(%arg0: i32) -> (i32, i32) {
    %c0_i32 = arith.constant 0 : i32
    %c0_i32_0 = arith.constant 0 : i32
    %c0_i32_1 = arith.constant 0 : i32
    return %c0_i32, %c0_i32_0 : i32, i32
  }
  func.func @transform_5(%arg0: i32) -> (i32, i32, i32) {
    %c0_i32 = arith.constant 0 : i32
    %c0_i32_0 = arith.constant 0 : i32
    %c0_i32_1 = arith.constant 0 : i32
    return %arg0, %c0_i32, %c0_i32_0 : i32, i32, i32
  }
}

module attributes {stable_mosaic.version = 11 : i64} {
  func.func @convnext_v2_block_kernel(%arg0: i32, %arg1: memref<1x16x128xf32, #tpu.memory_space<vmem>>, %arg2: memref<11x128xf32, #tpu.memory_space<vmem>>, %arg3: memref<3x128xf32, #tpu.memory_space<vmem>>, %arg4: memref<128x128xbf16, #tpu.memory_space<vmem>>, %arg5: memref<128x128xbf16, #tpu.memory_space<vmem>>, %arg6: memref<1x16x128xf32, #tpu.memory_space<vmem>>, %arg7: memref<1x22x128xf32, #tpu.memory_space<vmem>>) attributes {dimension_semantics = [#tpu.dimension_semantics<parallel>], iteration_bounds = array<i64: 2>, scalar_prefetch = 0 : i64, scratch_operands = 1 : i64, tpu.core_type = #tpu.core_type<tc>, window_params = [{transform_indices = @transform_0, window_bounds = array<i64: 1, 16, 128>}, {pipeline_mode = #tpu.pipeline_mode<synchronous>, transform_indices = @transform_1, window_bounds = array<i64: 11, 128>}, {pipeline_mode = #tpu.pipeline_mode<synchronous>, transform_indices = @transform_2, window_bounds = array<i64: 3, 128>}, {pipeline_mode = #tpu.pipeline_mode<synchronous>, transform_indices = @transform_3, window_bounds = array<i64: 128, 128>}, {pipeline_mode = #tpu.pipeline_mode<synchronous>, transform_indices = @transform_4, window_bounds = array<i64: 128, 128>}, {transform_indices = @transform_5, window_bounds = array<i64: 1, 16, 128>}]} {
    %c0 = arith.constant 0 : index
    %c0_0 = arith.constant 0 : index
    %0 = vector.load %arg2[%c0, %c0_0] : memref<11x128xf32, #tpu.memory_space<vmem>>, vector<11x128xf32>
    %c0_1 = arith.constant 0 : index
    %c0_2 = arith.constant 0 : index
    %1 = vector.load %arg3[%c0_1, %c0_2] : memref<3x128xf32, #tpu.memory_space<vmem>>, vector<3x128xf32>
    %cst = arith.constant 0.000000e+00 : f32
    %2 = vector.broadcast %cst : f32 to vector<1x3x128xf32>
    %c0_3 = arith.constant 0 : index
    %c0_4 = arith.constant 0 : index
    %c0_5 = arith.constant 0 : index
    %3 = vector.load %arg7[%c0_3, %c0_4, %c0_5] : memref<1x22x128xf32, #tpu.memory_space<vmem>>, vector<1x3x128xf32>
    tpu.vector_store %arg7[%c0_3, %c0_4, %c0_5], %2 {strides = array<i32>} : memref<1x22x128xf32, #tpu.memory_space<vmem>>, vector<1x3x128xf32>,
    %c0_6 = arith.constant 0 : index
    %c19 = arith.constant 19 : index
    %c0_7 = arith.constant 0 : index
    %4 = vector.load %arg7[%c0_6, %c19, %c0_7] : memref<1x22x128xf32, #tpu.memory_space<vmem>>, vector<1x3x128xf32>
    tpu.vector_store %arg7[%c0_6, %c19, %c0_7], %2 {strides = array<i32>} : memref<1x22x128xf32, #tpu.memory_space<vmem>>, vector<1x3x128xf32>,
    %c0_8 = arith.constant 0 : index
    %c0_9 = arith.constant 0 : index
    %c0_10 = arith.constant 0 : index
    %5 = vector.load %arg1[%c0_8, %c0_9, %c0_10] : memref<1x16x128xf32, #tpu.memory_space<vmem>>, vector<1x16x128xf32>
    %c0_11 = arith.constant 0 : index
    %c3 = arith.constant 3 : index
    %c0_12 = arith.constant 0 : index
    %6 = vector.load %arg7[%c0_11, %c3, %c0_12] : memref<1x22x128xf32, #tpu.memory_space<vmem>>, vector<1x16x128xf32>
    tpu.vector_store %arg7[%c0_11, %c3, %c0_12], %5 {strides = array<i32>} : memref<1x22x128xf32, #tpu.memory_space<vmem>>, vector<1x16x128xf32>,
    %cst_13 = arith.constant 0.000000e+00 : f32
    %7 = vector.broadcast %cst_13 : f32 to vector<1x16x128xf32>
    %8 = vector.extract_strided_slice %0 {offsets = [0, 0], sizes = [1, 128], strides = [1, 1]} : vector<11x128xf32> to vector<1x128xf32>
    %9 = vector.shape_cast %8 : vector<1x128xf32> to vector<1x1x128xf32>
    %c0_14 = arith.constant 0 : index
    %c0_15 = arith.constant 0 : index
    %c0_16 = arith.constant 0 : index
    %10 = vector.load %arg7[%c0_14, %c0_15, %c0_16] : memref<1x22x128xf32, #tpu.memory_space<vmem>>, vector<1x16x128xf32>
    %11 = vector.broadcast %9 : vector<1x1x128xf32> to vector<1x16x128xf32>
    %12 = arith.mulf %10, %11 : vector<1x16x128xf32>
    %13 = arith.addf %7, %12 : vector<1x16x128xf32>
    %14 = vector.extract_strided_slice %0 {offsets = [1, 0], sizes = [1, 128], strides = [1, 1]} : vector<11x128xf32> to vector<1x128xf32>
    %15 = vector.shape_cast %14 : vector<1x128xf32> to vector<1x1x128xf32>
    %c0_17 = arith.constant 0 : index
    %c1 = arith.constant 1 : index
    %c0_18 = arith.constant 0 : index
    %16 = vector.load %arg7[%c0_17, %c1, %c0_18] : memref<1x22x128xf32, #tpu.memory_space<vmem>>, vector<1x16x128xf32>
    %17 = vector.broadcast %15 : vector<1x1x128xf32> to vector<1x16x128xf32>
    %18 = arith.mulf %16, %17 : vector<1x16x128xf32>
    %19 = arith.addf %13, %18 : vector<1x16x128xf32>
    %20 = vector.extract_strided_slice %0 {offsets = [2, 0], sizes = [1, 128], strides = [1, 1]} : vector<11x128xf32> to vector<1x128xf32>
    %21 = vector.shape_cast %20 : vector<1x128xf32> to vector<1x1x128xf32>
    %c0_19 = arith.constant 0 : index
    %c2 = arith.constant 2 : index
    %c0_20 = arith.constant 0 : index
    %22 = vector.load %arg7[%c0_19, %c2, %c0_20] : memref<1x22x128xf32, #tpu.memory_space<vmem>>, vector<1x16x128xf32>
    %23 = vector.broadcast %21 : vector<1x1x128xf32> to vector<1x16x128xf32>
    %24 = arith.mulf %22, %23 : vector<1x16x128xf32>
    %25 = arith.addf %19, %24 : vector<1x16x128xf32>
    %26 = vector.extract_strided_slice %0 {offsets = [3, 0], sizes = [1, 128], strides = [1, 1]} : vector<11x128xf32> to vector<1x128xf32>
    %27 = vector.shape_cast %26 : vector<1x128xf32> to vector<1x1x128xf32>
    %c0_21 = arith.constant 0 : index
    %c3_22 = arith.constant 3 : index
    %c0_23 = arith.constant 0 : index
    %28 = vector.load %arg7[%c0_21, %c3_22, %c0_23] : memref<1x22x128xf32, #tpu.memory_space<vmem>>, vector<1x16x128xf32>
    %29 = vector.broadcast %27 : vector<1x1x128xf32> to vector<1x16x128xf32>
    %30 = arith.mulf %28, %29 : vector<1x16x128xf32>
    %31 = arith.addf %25, %30 : vector<1x16x128xf32>
    %32 = vector.extract_strided_slice %0 {offsets = [4, 0], sizes = [1, 128], strides = [1, 1]} : vector<11x128xf32> to vector<1x128xf32>
    %33 = vector.shape_cast %32 : vector<1x128xf32> to vector<1x1x128xf32>
    %c0_24 = arith.constant 0 : index
    %c4 = arith.constant 4 : index
    %c0_25 = arith.constant 0 : index
    %34 = vector.load %arg7[%c0_24, %c4, %c0_25] : memref<1x22x128xf32, #tpu.memory_space<vmem>>, vector<1x16x128xf32>
    %35 = vector.broadcast %33 : vector<1x1x128xf32> to vector<1x16x128xf32>
    %36 = arith.mulf %34, %35 : vector<1x16x128xf32>
    %37 = arith.addf %31, %36 : vector<1x16x128xf32>
    %38 = vector.extract_strided_slice %0 {offsets = [5, 0], sizes = [1, 128], strides = [1, 1]} : vector<11x128xf32> to vector<1x128xf32>
    %39 = vector.shape_cast %38 : vector<1x128xf32> to vector<1x1x128xf32>
    %c0_26 = arith.constant 0 : index
    %c5 = arith.constant 5 : index
    %c0_27 = arith.constant 0 : index
    %40 = vector.load %arg7[%c0_26, %c5, %c0_27] : memref<1x22x128xf32, #tpu.memory_space<vmem>>, vector<1x16x128xf32>
    %41 = vector.broadcast %39 : vector<1x1x128xf32> to vector<1x16x128xf32>
    %42 = arith.mulf %40, %41 : vector<1x16x128xf32>
    %43 = arith.addf %37, %42 : vector<1x16x128xf32>
    %44 = vector.extract_strided_slice %0 {offsets = [6, 0], sizes = [1, 128], strides = [1, 1]} : vector<11x128xf32> to vector<1x128xf32>
    %45 = vector.shape_cast %44 : vector<1x128xf32> to vector<1x1x128xf32>
    %c0_28 = arith.constant 0 : index
    %c6 = arith.constant 6 : index
    %c0_29 = arith.constant 0 : index
    %46 = vector.load %arg7[%c0_28, %c6, %c0_29] : memref<1x22x128xf32, #tpu.memory_space<vmem>>, vector<1x16x128xf32>
    %47 = vector.broadcast %45 : vector<1x1x128xf32> to vector<1x16x128xf32>
    %48 = arith.mulf %46, %47 : vector<1x16x128xf32>
    %49 = arith.addf %43, %48 : vector<1x16x128xf32>
    %50 = vector.extract_strided_slice %0 {offsets = [7, 0], sizes = [1, 128], strides = [1, 1]} : vector<11x128xf32> to vector<1x128xf32>
    %51 = vector.shape_cast %50 : vector<1x128xf32> to vector<1x1x128xf32>
    %52 = vector.broadcast %51 : vector<1x1x128xf32> to vector<1x16x128xf32>
    %53 = arith.addf %49, %52 : vector<1x16x128xf32>
    %cst_30 = arith.constant dense<0.000000e+00> : vector<1x16xf32>
    %54 = vector.multi_reduction <add>, %53, %cst_30 [2] : vector<1x16x128xf32> to vector<1x16xf32>
    %55 = vector.shape_cast %54 : vector<1x16xf32> to vector<1x16x1xf32>
    %cst_31 = arith.constant 3.125000e-02 : f32
    %56 = vector.broadcast %cst_31 : f32 to vector<1x16x1xf32>
    %57 = arith.mulf %55, %56 : vector<1x16x1xf32>
    %58 = arith.mulf %53, %53 : vector<1x16x128xf32>
    %cst_32 = arith.constant dense<0.000000e+00> : vector<1x16xf32>
    %59 = vector.multi_reduction <add>, %58, %cst_32 [2] : vector<1x16x128xf32> to vector<1x16xf32>
    %60 = vector.shape_cast %59 : vector<1x16xf32> to vector<1x16x1xf32>
    %cst_33 = arith.constant 3.125000e-02 : f32
    %61 = vector.broadcast %cst_33 : f32 to vector<1x16x1xf32>
    %62 = arith.mulf %60, %61 : vector<1x16x1xf32>
    %63 = arith.mulf %57, %57 : vector<1x16x1xf32>
    %64 = arith.subf %62, %63 : vector<1x16x1xf32>
    %65 = vector.broadcast %57 : vector<1x16x1xf32> to vector<1x16x128xf32>
    %66 = arith.subf %53, %65 : vector<1x16x128xf32>
    %cst_34 = arith.constant 9.99999997E-7 : f32
    %67 = vector.broadcast %cst_34 : f32 to vector<1x16x1xf32>
    %68 = arith.addf %64, %67 : vector<1x16x1xf32>
    %69 = math.rsqrt %68 : vector<1x16x1xf32>
    %70 = vector.broadcast %69 : vector<1x16x1xf32> to vector<1x16x128xf32>
    %71 = arith.mulf %66, %70 : vector<1x16x128xf32>
    %72 = vector.extract_strided_slice %0 {offsets = [8, 0], sizes = [1, 128], strides = [1, 1]} : vector<11x128xf32> to vector<1x128xf32>
    %73 = vector.shape_cast %72 : vector<1x128xf32> to vector<1x1x128xf32>
    %74 = vector.broadcast %73 : vector<1x1x128xf32> to vector<1x16x128xf32>
    %75 = arith.mulf %71, %74 : vector<1x16x128xf32>
    %76 = vector.extract_strided_slice %0 {offsets = [9, 0], sizes = [1, 128], strides = [1, 1]} : vector<11x128xf32> to vector<1x128xf32>
    %77 = vector.shape_cast %76 : vector<1x128xf32> to vector<1x1x128xf32>
    %78 = vector.broadcast %77 : vector<1x1x128xf32> to vector<1x16x128xf32>
    %79 = arith.addf %75, %78 : vector<1x16x128xf32>
    %80 = vector.shape_cast %79 : vector<1x16x128xf32> to vector<16x128xf32>
    %81 = arith.truncf %80 : vector<16x128xf32> to vector<16x128xbf16>
    %c0_35 = arith.constant 0 : index
    %c0_36 = arith.constant 0 : index
    %82 = vector.load %arg4[%c0_35, %c0_36] : memref<128x128xbf16, #tpu.memory_space<vmem>>, vector<128x128xbf16>
    %cst_37 = arith.constant dense<0.000000e+00> : vector<16x128xf32>
    %83 = tpu.matmul %81, %82, %cst_37 {dimension_numbers = #tpu.dot_dimension_numbers<[1], [0], [0], [1], [0, 0, 1, 1], [], []>} : vector<16x128xbf16>, vector<128x128xbf16>, vector<16x128xf32> -> vector<16x128xf32>
    %84 = vector.extract_strided_slice %1 {offsets = [0, 0], sizes = [1, 128], strides = [1, 1]} : vector<3x128xf32> to vector<1x128xf32>
    %85 = vector.broadcast %84 : vector<1x128xf32> to vector<16x128xf32>
    %86 = arith.addf %83, %85 : vector<16x128xf32>
    %cst_38 = arith.constant 5.000000e-01 : f32
    %87 = vector.broadcast %cst_38 : f32 to vector<16x128xf32>
    %88 = arith.mulf %87, %86 : vector<16x128xf32>
    %cst_39 = arith.constant 0.707106769 : f32
    %89 = vector.broadcast %cst_39 : f32 to vector<16x128xf32>
    %90 = arith.mulf %86, %89 : vector<16x128xf32>
    %91 = math.erf %90 : vector<16x128xf32>
    %cst_40 = arith.constant 1.000000e+00 : f32
    %92 = vector.broadcast %cst_40 : f32 to vector<16x128xf32>
    %93 = arith.addf %92, %91 : vector<16x128xf32>
    %94 = arith.mulf %88, %93 : vector<16x128xf32>
    %95 = vector.shape_cast %94 : vector<16x128xf32> to vector<1x16x128xf32>
    %96 = arith.mulf %95, %95 : vector<1x16x128xf32>
    %cst_41 = arith.constant dense<0.000000e+00> : vector<1x128xf32>
    %97 = vector.multi_reduction <add>, %96, %cst_41 [1] : vector<1x16x128xf32> to vector<1x128xf32>
    %98 = vector.shape_cast %97 : vector<1x128xf32> to vector<1x1x128xf32>
    %99 = math.sqrt %98 : vector<1x1x128xf32>
    %100 = arith.truncf %95 : vector<1x16x128xf32> to vector<1x16x128xbf16>
    %cst_42 = arith.constant dense<0.000000e+00> : vector<1x1xf32>
    %101 = vector.multi_reduction <add>, %99, %cst_42 [2] : vector<1x1x128xf32> to vector<1x1xf32>
    %102 = vector.shape_cast %101 : vector<1x1xf32> to vector<1x1x1xf32>
    %cst_43 = arith.constant 1.562500e-02 : f32
    %103 = vector.broadcast %cst_43 : f32 to vector<1x1x1xf32>
    %104 = arith.mulf %102, %103 : vector<1x1x1xf32>
    %cst_44 = arith.constant 9.99999997E-7 : f32
    %105 = vector.broadcast %cst_44 : f32 to vector<1x1x1xf32>
    %106 = arith.addf %104, %105 : vector<1x1x1xf32>
    %107 = tpu.reciprocal %106 {approx = true} : vector<1x1x1xf32> -> vector<1x1x1xf32>
    %108 = vector.broadcast %107 : vector<1x1x1xf32> to vector<1x1x128xf32>
    %109 = arith.mulf %99, %108 : vector<1x1x128xf32>
    %110 = vector.extract_strided_slice %1 {offsets = [1, 0], sizes = [1, 128], strides = [1, 1]} : vector<3x128xf32> to vector<1x128xf32>
    %111 = vector.shape_cast %110 : vector<1x128xf32> to vector<1x1x128xf32>
    %112 = arith.mulf %111, %109 : vector<1x1x128xf32>
    %cst_45 = arith.constant 1.000000e+00 : f32
    %113 = vector.broadcast %cst_45 : f32 to vector<1x1x128xf32>
    %114 = arith.addf %112, %113 : vector<1x1x128xf32>
    %115 = arith.truncf %114 : vector<1x1x128xf32> to vector<1x1x128xbf16>
    %116 = vector.extract_strided_slice %1 {offsets = [2, 0], sizes = [1, 128], strides = [1, 1]} : vector<3x128xf32> to vector<1x128xf32>
    %117 = vector.shape_cast %116 : vector<1x128xf32> to vector<1x1x128xf32>
    %118 = arith.truncf %117 : vector<1x1x128xf32> to vector<1x1x128xbf16>
    %119 = vector.broadcast %115 : vector<1x1x128xbf16> to vector<1x16x128xbf16>
    %120 = arith.mulf %100, %119 : vector<1x16x128xbf16>
    %121 = vector.broadcast %118 : vector<1x1x128xbf16> to vector<1x16x128xbf16>
    %122 = arith.addf %120, %121 : vector<1x16x128xbf16>
    %123 = vector.shape_cast %122 : vector<1x16x128xbf16> to vector<16x128xbf16>
    %c0_46 = arith.constant 0 : index
    %c0_47 = arith.constant 0 : index
    %124 = vector.load %arg5[%c0_46, %c0_47] : memref<128x128xbf16, #tpu.memory_space<vmem>>, vector<128x128xbf16>
    %cst_48 = arith.constant dense<0.000000e+00> : vector<16x128xf32>
    %125 = tpu.matmul %123, %124, %cst_48 {dimension_numbers = #tpu.dot_dimension_numbers<[1], [0], [0], [1], [0, 0, 1, 1], [], []>} : vector<16x128xbf16>, vector<128x128xbf16>, vector<16x128xf32> -> vector<16x128xf32>
    %126 = vector.shape_cast %125 : vector<16x128xf32> to vector<1x16x128xf32>
    %127 = vector.extract_strided_slice %0 {offsets = [10, 0], sizes = [1, 128], strides = [1, 1]} : vector<11x128xf32> to vector<1x128xf32>
    %128 = vector.shape_cast %127 : vector<1x128xf32> to vector<1x1x128xf32>
    %129 = vector.broadcast %128 : vector<1x1x128xf32> to vector<1x16x128xf32>
    %130 = arith.addf %126, %129 : vector<1x16x128xf32>
    %c0_49 = arith.constant 0 : index
    %c0_50 = arith.constant 0 : index
    %c0_51 = arith.constant 0 : index
    %131 = vector.load %arg1[%c0_49, %c0_50, %c0_51] : memref<1x16x128xf32, #tpu.memory_space<vmem>>, vector<1x16x128xf32>
    %132 = arith.addf %130, %131 : vector<1x16x128xf32>
    %c0_52 = arith.constant 0 : index
    %c0_53 = arith.constant 0 : index
    %c0_54 = arith.constant 0 : index
    %133 = vector.load %arg6[%c0_52, %c0_53, %c0_54] : memref<1x16x128xf32, #tpu.memory_space<vmem>>, vector<1x16x128xf32>
    tpu.vector_store %arg6[%c0_52, %c0_53, %c0_54], %132 {strides = array<i32>} : memref<1x16x128xf32, #tpu.memory_space<vmem>>, vector<1x16x128xf32>,
    return
  }
  func.func @transform_0(%arg0: i32) -> (i32, i32, i32) {
    %c0_i32 = arith.constant 0 : i32
    %c0_i32_0 = arith.constant 0 : i32
    %c0_i32_1 = arith.constant 0 : i32
    return %arg0, %c0_i32, %c0_i32_0 : i32, i32, i32
  }
  func.func @transform_1(%arg0: i32) -> (i32, i32) {
    %c0_i32 = arith.constant 0 : i32
    %c0_i32_0 = arith.constant 0 : i32
    %c0_i32_1 = arith.constant 0 : i32
    return %c0_i32, %c0_i32_0 : i32, i32
  }
  func.func @transform_2(%arg0: i32) -> (i32, i32) {
    %c0_i32 = arith.constant 0 : i32
    %c0_i32_0 = arith.constant 0 : i32
    %c0_i32_1 = arith.constant 0 : i32
    return %c0_i32, %c0_i32_0 : i32, i32
  }
  func.func @transform_3(%arg0: i32) -> (i32, i32) {
    %c0_i32 = arith.constant 0 : i32
    %c0_i32_0 = arith.constant 0 : i32
    %c0_i32_1 = arith.constant 0 : i32
    return %c0_i32, %c0_i32_0 : i32, i32
  }
  func.func @transform_4(%arg0: i32) -> (i32, i32) {
    %c0_i32 = arith.constant 0 : i32
    %c0_i32_0 = arith.constant 0 : i32
    %c0_i32_1 = arith.constant 0 : i32
    return %c0_i32, %c0_i32_0 : i32, i32
  }
  func.func @transform_5(%arg0: i32) -> (i32, i32, i32) {
    %c0_i32 = arith.constant 0 : i32
    %c0_i32_0 = arith.constant 0 : i32
    %c0_i32_1 = arith.constant 0 : i32
    return %arg0, %c0_i32, %c0_i32_0 : i32, i32, i32
  }
}

</mosaic_0001>

<llo_original>
// kernel: tpu_custom_call.1
$region0: #{tpu_custom_call.1}
  #allocation0 [shape = 'u32[]', space=smem, size = 0x4, offset = 0x4, fixed_abs, tag = 'smem constant byte address 0x4 - core index']
  #allocation1 [shape = 'u32[144,128]{1,0:T(1,128)}', space=vmem, size = 0x12000, scoped, tag = 'internal scratch']
  #allocation2 [shape = 'f32[1,22,128]{2,1,0:T(8,128)}', space=vmem, size = 0x3000, scoped, tag = 'scratch operand']
  %s0 = inlined_call_operand.hbm [shape: f32[2,16,128], index: 0, kind: input, shape index: {}]
  %s1 = inlined_call_operand.hbm [shape: f32[11,128], index: 1, kind: input, shape index: {}]
  %s2 = inlined_call_operand.vmem [shape: f32[3,128], index: 2, kind: input, shape index: {}]
  %s3 = inlined_call_operand.hbm [shape: bf16[128,128], index: 3, kind: input, shape index: {}]
  %s4 = inlined_call_operand.hbm [shape: bf16[128,128], index: 4, kind: input, shape index: {}]
  %s5 = inlined_call_operand.hbm [shape: f32[2,16,128], index: 5, kind: output, shape index: {}]
  %s6 = sld [smem:[#allocation0]]
  $region69: #{tpu_custom_call.1} parent=0
    _
  %s8 = ssub.s32 1, %s6
  %s9 = scalar_select 0, %s8, %s6
  $region1: #{tpu_custom_call.1} parent=0
    #allocation3 [shape = 'u8[16384]{0}', space=vmem, size = 0x4000, scoped, tag = 'input window, operand 0']
    #allocation4 [shape = 's32[2]{0}', space=sflag, size = 0x8, scoped, tag = 'scoped memory for tpu_custom_call.1']
    #allocation5 [shape = 's32[2]{0}', space=sflag, size = 0x8, scoped, tag = 'scoped memory for tpu_custom_call.1']
    #allocation6 [shape = 'u8[8192]{0}', space=vmem, size = 0x2000, scoped, tag = 'input window, operand 1, single buffered']
    #allocation7 [shape = 's32[1]{0}', space=sflag, size = 0x4, scoped, tag = 'scoped memory for tpu_custom_call.1']
    #allocation8 [shape = 'u8[32768]{0}', space=vmem, size = 0x8000, scoped, tag = 'input window, operand 3, single buffered']
    #allocation9 [shape = 'u8[32768]{0}', space=vmem, size = 0x8000, scoped, tag = 'input window, operand 4, single buffered']
    #allocation10 [shape = 's32[1]{0}', space=sflag, size = 0x4, scoped, tag = 'scoped memory for tpu_custom_call.1']
    #allocation11 [shape = 'u8[16384]{0}', space=vmem, size = 0x4000, scoped, tag = 'output window, operand 0']
    %10 = vsyncpa [#allocation4], 0
    %s11 = scalar_lea.sflag [#allocation4], 1
    %12 = vsyncpa %s11, 0
    %13 = vsyncpa [#allocation7], 0
    %14 = vsyncpa [#allocation10], 0
    %15 = vsyncpa [#allocation5], 0
    %s16 = scalar_lea.sflag [#allocation5], 1
    %17 = vsyncpa %s16, 0
    loop: start=0, step=1, limit=4
    $region2: #{tpu_custom_call.1} parent=1 // loop_pre_header
      _
    $region3: #{tpu_custom_call.1} parent=1 // loop_header
      %s19 = sphi 0, %s23
      %p20 = scmp.ge.s32.totalorder %s19, 4
      %s29 = sphi 0, %s31
      %s32 = sphi 0, %s29
      %s33 = sphi 0, %s32
      %s49 = sphi 0, %s33
      %s53 = sphi 0, %s53
      %s55 = sphi 0, %s53
      %s56 = sphi 0, %s55
      %s70 = sphi 0, %s56
      %s74 = sphi 0, %s74
      %s76 = sphi 0, %s74
      %s77 = sphi 0, %s76
      %s91 = sphi 0, %s77
      %s95 = sphi 0, %s95
      %s97 = sphi 0, %s95
      %s98 = sphi 0, %s97
      %s112 = sphi 0, %s98
      %s116 = sphi 0, %s116
      %s118 = sphi 0, %s116
      %s119 = sphi 0, %s118
      %s133 = sphi 0, %s119
      %s139 = sphi 0, %s141
      %s142 = sphi 0, %s139
      %s143 = sphi 0, %s142
      %s159 = sphi 0, %s143
    $region4: #{tpu_custom_call.1} parent=1 // loop_header_branch
      %22 = sbr.rel (%p20) target = $region8
    $region5: #{tpu_custom_call.1} parent=1 // loop_body
      %s24 = ssub.s32 %s19, 1
      %s25 = ssub.s32 %s19, 2
      %s26 = sadd.s32 %s19, 1
      %s27 = ssub.s32 %s19, %s26
      %p28 = scmp.eq.s32.totalorder %s27, 0
      %s30 = sadd.s32 %s29, 1
      %s31 = scalar_select %p28, %s29, %s30
      %p34 = pneg %p28
      %p35 = scmp.eq.s32.totalorder %s19, 1
      %p36 = por %p34, %p35
      %p37 = scmp.ne.s32.totalorder %s29, %s32
      %p38 = scmp.eq.s32.totalorder %s19, 0
      %p39 = por %p37, %p38
      %p40 = scmp.ne.s32.totalorder %s29, %s32
      %p41 = scmp.eq.s32.totalorder %s24, 1
      %p42 = por %p40, %p41
      %p43 = scmp.ne.s32.totalorder %s32, %s33
      %p44 = scmp.eq.s32.totalorder %s24, 0
      %p45 = por %p43, %p44
      %p46 = scmp.ne.s32.totalorder %s32, %s33
      %p47 = scmp.eq.s32.totalorder %s25, 1
      %p48 = por %p46, %p47
      %p50 = scmp.ne.s32.totalorder %s33, %s49
      %p51 = scmp.eq.s32.totalorder %s25, 0
      %p52 = por %p50, %p51
      %s54 = sadd.s32 %s53, 1
      %p57 = scmp.eq.s32.totalorder %s19, 1
      %p58 = scmp.ne.s32.totalorder %s53, %s55
      %p59 = scmp.eq.s32.totalorder %s19, 0
      %p60 = por %p58, %p59
      %p61 = scmp.ne.s32.totalorder %s53, %s55
      %p62 = scmp.eq.s32.totalorder %s24, 1
      %p63 = por %p61, %p62
      %p64 = scmp.ne.s32.totalorder %s55, %s56
      %p65 = scmp.eq.s32.totalorder %s24, 0
      %p66 = por %p64, %p65
      %p67 = scmp.ne.s32.totalorder %s55, %s56
      %p68 = scmp.eq.s32.totalorder %s25, 1
      %p69 = por %p67, %p68
      %p71 = scmp.ne.s32.totalorder %s56, %s70
      %p72 = scmp.eq.s32.totalorder %s25, 0
      %p73 = por %p71, %p72
      %s75 = sadd.s32 %s74, 1
      %p78 = scmp.eq.s32.totalorder %s19, 1
      %p79 = scmp.ne.s32.totalorder %s74, %s76
      %p80 = scmp.eq.s32.totalorder %s19, 0
      %p81 = por %p79, %p80
      %p82 = scmp.ne.s32.totalorder %s74, %s76
      %p83 = scmp.eq.s32.totalorder %s24, 1
      %p84 = por %p82, %p83
      %p85 = scmp.ne.s32.totalorder %s76, %s77
      %p86 = scmp.eq.s32.totalorder %s24, 0
      %p87 = por %p85, %p86
      %p88 = scmp.ne.s32.totalorder %s76, %s77
      %p89 = scmp.eq.s32.totalorder %s25, 1
      %p90 = por %p88, %p89
      %p92 = scmp.ne.s32.totalorder %s77, %s91
      %p93 = scmp.eq.s32.totalorder %s25, 0
      %p94 = por %p92, %p93
      %s96 = sadd.s32 %s95, 1
      %p99 = scmp.eq.s32.totalorder %s19, 1
      %p100 = scmp.ne.s32.totalorder %s95, %s97
      %p101 = scmp.eq.s32.totalorder %s19, 0
      %p102 = por %p100, %p101
      %p103 = scmp.ne.s32.totalorder %s95, %s97
      %p104 = scmp.eq.s32.totalorder %s24, 1
      %p105 = por %p103, %p104
      %p106 = scmp.ne.s32.totalorder %s97, %s98
      %p107 = scmp.eq.s32.totalorder %s24, 0
      %p108 = por %p106, %p107
      %p109 = scmp.ne.s32.totalorder %s97, %s98
      %p110 = scmp.eq.s32.totalorder %s25, 1
      %p111 = por %p109, %p110
      %p113 = scmp.ne.s32.totalorder %s98, %s112
      %p114 = scmp.eq.s32.totalorder %s25, 0
      %p115 = por %p113, %p114
      %s117 = sadd.s32 %s116, 1
      %p120 = scmp.eq.s32.totalorder %s19, 1
      %p121 = scmp.ne.s32.totalorder %s116, %s118
      %p122 = scmp.eq.s32.totalorder %s19, 0
      %p123 = por %p121, %p122
      %p124 = scmp.ne.s32.totalorder %s116, %s118
      %p125 = scmp.eq.s32.totalorder %s24, 1
      %p126 = por %p124, %p125
      %p127 = scmp.ne.s32.totalorder %s118, %s119
      %p128 = scmp.eq.s32.totalorder %s24, 0
      %p129 = por %p127, %p128
      %p130 = scmp.ne.s32.totalorder %s118, %s119
      %p131 = scmp.eq.s32.totalorder %s25, 1
      %p132 = por %p130, %p131
      %p134 = scmp.ne.s32.totalorder %s119, %s133
      %p135 = scmp.eq.s32.totalorder %s25, 0
      %p136 = por %p134, %p135
      %s137 = ssub.s32 %s19, %s26
      %p138 = scmp.eq.s32.totalorder %s137, 0
      %s140 = sadd.s32 %s139, 1
      %s141 = scalar_select %p138, %s139, %s140
      %p144 = pneg %p138
      %p145 = scmp.eq.s32.totalorder %s19, 1
      %p146 = por %p144, %p145
      %p147 = scmp.ne.s32.totalorder %s139, %s142
      %p148 = scmp.eq.s32.totalorder %s19, 0
      %p149 = por %p147, %p148
      %p150 = scmp.ne.s32.totalorder %s139, %s142
      %p151 = scmp.eq.s32.totalorder %s24, 1
      %p152 = por %p150, %p151
      %p153 = scmp.ne.s32.totalorder %s142, %s143
      %p154 = scmp.eq.s32.totalorder %s24, 0
      %p155 = por %p153, %p154
      %p156 = scmp.ne.s32.totalorder %s142, %s143
      %p157 = scmp.eq.s32.totalorder %s25, 1
      %p158 = por %p156, %p157
      %p160 = scmp.ne.s32.totalorder %s143, %s159
      %p161 = scmp.eq.s32.totalorder %s25, 0
      %p162 = por %p160, %p161
      %p163 = scmp.le.s32.totalorder 1, %s19
      %p164 = scmp.lt.s32.totalorder %s19, 3
      %p165 = pnand %p163, %p164
      %p166 = pneg %p165
      // Predicated region
      $region9: #{tpu_custom_call.1} parent=5 // pred_check
        _
      $region10: #{tpu_custom_call.1} parent=5 // pred_check_branch
        %168 = sbr.rel (%p165) target = $region12
      $region11: #{tpu_custom_call.1} parent=5 // pred_region
        %s169 = ssub.s32 %s19, 1
        // Predicated region
        $region13: #{tpu_custom_call.1} parent=11 // pred_check
          %p170 = pneg %p66
        $region14: #{tpu_custom_call.1} parent=11 // pred_check_branch
          %172 = sbr.rel (%p170) target = $region16
        $region15: #{tpu_custom_call.1} parent=11 // pred_region
          %s174 = ssub.s32 256, 256
          %175 = vsyncadd [#allocation7], %s174
          %s176 = sshll.u32 [#allocation6], 4
          %s177 = int_to_ptr.vmem [resolvable:$true] %s176
          %182 = dma.hbm_to_vmem [thread:$0]  %s1, 256, %s177, [#allocation7], 128, 128, 8
        $region16: #{tpu_custom_call.1} parent=11 // pred_fallthru
          _
        // Predicated region
        $region17: #{tpu_custom_call.1} parent=11 // pred_check
          %p183 = pneg %p87
        $region18: #{tpu_custom_call.1} parent=11 // pred_check_branch
          %185 = sbr.rel (%p183) target = $region20
        $region19: #{tpu_custom_call.1} parent=11 // pred_region
          _
        $region20: #{tpu_custom_call.1} parent=11 // pred_fallthru
          _
        // Predicated region
        $region21: #{tpu_custom_call.1} parent=11 // pred_check
          %p186 = pneg %p108
        $region22: #{tpu_custom_call.1} parent=11 // pred_check_branch
          %188 = sbr.rel (%p186) target = $region24
        $region23: #{tpu_custom_call.1} parent=11 // pred_region
          %s190 = ssub.s32 1024, 1024
          %191 = vsyncadd [#allocation7], %s190
          %s192 = sshll.u32 [#allocation8], 4
          %s193 = int_to_ptr.vmem [resolvable:$true] %s192
          %198 = dma.hbm_to_vmem [thread:$0]  %s3, 1024, %s193, [#allocation7], 64, 64, 4
        $region24: #{tpu_custom_call.1} parent=11 // pred_fallthru
          _
        // Predicated region
        $region25: #{tpu_custom_call.1} parent=11 // pred_check
          %p199 = pneg %p129
        $region26: #{tpu_custom_call.1} parent=11 // pred_check_branch
          %201 = sbr.rel (%p199) target = $region28
        $region27: #{tpu_custom_call.1} parent=11 // pred_region
          %s203 = ssub.s32 1024, 1024
          %204 = vsyncadd [#allocation10], %s203
          %s205 = sshll.u32 [#allocation9], 4
          %s206 = int_to_ptr.vmem [resolvable:$true] %s205
          %211 = dma.hbm_to_vmem [thread:$0]  %s4, 1024, %s206, [#allocation10], 64, 64, 4
        $region28: #{tpu_custom_call.1} parent=11 // pred_fallthru
          _
      $region12: #{tpu_custom_call.1} parent=5 // pred_fallthru
        _
      %p212 = scmp.lt.s32.totalorder %s19, 2
      // Predicated region
      $region29: #{tpu_custom_call.1} parent=5 // pred_check
        %p213 = pneg %p212
      $region30: #{tpu_custom_call.1} parent=5 // pred_check_branch
        %215 = sbr.rel (%p213) target = $region32
      $region31: #{tpu_custom_call.1} parent=5 // pred_region
        // Predicated region
        $region33: #{tpu_custom_call.1} parent=31 // pred_check
          %p216 = pneg %p39
        $region34: #{tpu_custom_call.1} parent=31 // pred_check_branch
          %218 = sbr.rel (%p216) target = $region36
        $region35: #{tpu_custom_call.1} parent=31 // pred_region
          %s219 = sand.u32 %s29, 1
          %s220 = scalar_lea.sflag [#allocation4], %s219
          %s221 = sand.u32 %s29, 1
          %s222 = smul.addr %s221, 16
          %s223 = scalar_lea.vmem [#allocation3], %s222
          %s225 = ssub.s32 256, 256
          %226 = vsyncadd %s220, %s225
          %s227 = smul.addr %s19, 2
          %s228 = smul.addr %s227, 128
          %s229 = scalar_lea.hbm %s0, %s228
          %s230 = sshll.u32 %s223, 4
          %s231 = int_to_ptr.vmem [resolvable:$true] %s230
          %236 = dma.hbm_to_vmem [thread:$0]  %s229, 256, %s231, %s220, 128, 128, 8
        $region36: #{tpu_custom_call.1} parent=31 // pred_fallthru
          _
      $region32: #{tpu_custom_call.1} parent=5 // pred_fallthru
        _
      %p237 = scmp.le.s32.totalorder 1, %s19
      %p238 = scmp.lt.s32.totalorder %s19, 3
      %p239 = pnand %p237, %p238
      %p240 = pneg %p239
      // Predicated region
      $region37: #{tpu_custom_call.1} parent=5 // pred_check
        _
      $region38: #{tpu_custom_call.1} parent=5 // pred_check_branch
        %242 = sbr.rel (%p239) target = $region40
      $region39: #{tpu_custom_call.1} parent=5 // pred_region
        %s243 = ssub.s32 %s19, 1
        %s244 = sand.u32 %s32, 1
        %s245 = scalar_lea.sflag [#allocation4], %s244
        %s246 = sand.u32 %s32, 1
        %s247 = smul.addr %s246, 16
        %s248 = scalar_lea.vmem [#allocation3], %s247
        // Predicated region
        $region41: #{tpu_custom_call.1} parent=39 // pred_check
          %p249 = pneg %p45
        $region42: #{tpu_custom_call.1} parent=39 // pred_check_branch
          %251 = sbr.rel (%p249) target = $region44
        $region43: #{tpu_custom_call.1} parent=39 // pred_region
          %252 = dma.done %s245, 256
        $region44: #{tpu_custom_call.1} parent=39 // pred_fallthru
          _
        // Predicated region
        $region45: #{tpu_custom_call.1} parent=39 // pred_check
          %p253 = pneg %p66
        $region46: #{tpu_custom_call.1} parent=39 // pred_check_branch
          %255 = sbr.rel (%p253) target = $region48
        $region47: #{tpu_custom_call.1} parent=39 // pred_region
          %256 = dma.done [#allocation7], 256
        $region48: #{tpu_custom_call.1} parent=39 // pred_fallthru
          _
        // Predicated region
        $region49: #{tpu_custom_call.1} parent=39 // pred_check
          %p257 = pneg %p108
        $region50: #{tpu_custom_call.1} parent=39 // pred_check_branch
          %259 = sbr.rel (%p257) target = $region52
        $region51: #{tpu_custom_call.1} parent=39 // pred_region
          %260 = dma.done [#allocation7], 1024
        $region52: #{tpu_custom_call.1} parent=39 // pred_fallthru
          _
        // Predicated region
        $region53: #{tpu_custom_call.1} parent=39 // pred_check
          %p261 = pneg %p129
        $region54: #{tpu_custom_call.1} parent=39 // pred_check_branch
          %263 = sbr.rel (%p261) target = $region56
        $region55: #{tpu_custom_call.1} parent=39 // pred_region
          %264 = dma.done [#allocation10], 1024
        $region56: #{tpu_custom_call.1} parent=39 // pred_fallthru
          _
        %s265 = sand.u32 %s32, 1
        %s266 = scalar_lea.sflag [#allocation4], %s265
        %s267 = sand.u32 %s32, 1
        %s268 = smul.addr %s267, 16
        %s269 = scalar_lea.vmem [#allocation3], %s268
        %p270 = pneg %p45
        %p271 = pneg %p42
        %p272 = pneg %p66
        %p273 = pneg %p63
        %p274 = pneg %p87
        %p275 = pneg %p84
        %p276 = pneg %p108
        %p277 = pneg %p105
        %p278 = pneg %p129
        %p279 = pneg %p126
        %p280 = pneg %p155
        %p281 = pneg %p152
        %s282 = sand.u32 %s142, 1
        %s283 = scalar_lea.sflag [#allocation5], %s282
        %s284 = sand.u32 %s142, 1
        %s285 = smul.addr %s284, 16
        %s286 = scalar_lea.vmem [#allocation11], %s285
        %v288 = vld [vmem:[#allocation6] sm:$0xff]
        %v289 = vld [vmem:[#allocation6 + $0x8] sm:$0x7]
        %v290 = vld [vmem:[%s2] sm:$0x7]
        %291 = vst [vmem:[#allocation2] sm:$0x7] 0.0
        %292 = vst [vmem:[#allocation2 + $0x13] sm:$0x7] 0.0
        %v293 = vld [vmem:[%s248] sm:$0xff]
        %v294 = vld [vmem:[%s248 + $0x8] sm:$0xff]
        %295 = vst [vmem:[#allocation2 + $0x3] sm:$0xff] %v293
        %296 = vst [vmem:[#allocation2 + $0xb] sm:$0xff] %v294
        %v297 = vld [vmem:[#allocation2] sm:$0xff]
        %v298 = vld [vmem:[#allocation2 + $0x8] sm:$0xff]
        %v299 = vlaneseq
        %v300 = vshrl.u32 %v299, 7
        %v301 = vsub.s32 0, %v300
        %v302 = vrot.slane %v288, %v301
        %v303 = vmul.f32 %v297, %v302
        %v304 = vmul.f32 %v298, %v302
        %v305 = vadd.f32 %v303, 0.0
        %v306 = vadd.f32 %v304, 0.0
        %v307 = vld [vmem:[#allocation2 + $0x1] sm:$0xff]
        %v308 = vld [vmem:[#allocation2 + $0x9] sm:$0xff]
        %v309 = vlaneseq
        %v310 = vshrl.u32 %v309, 7
        %v311 = vsub.s32 1, %v310
        %v312 = vrot.slane %v288, %v311
        %v313 = vmul.f32 %v307, %v312
        %v314 = vmul.f32 %v308, %v312
        %v315 = vadd.f32 %v305, %v313
        %v316 = vadd.f32 %v306, %v314
        %v317 = vld [vmem:[#allocation2 + $0x2] sm:$0xff]
        %v318 = vld [vmem:[#allocation2 + $0xa] sm:$0xff]
        %v319 = vlaneseq
        %v320 = vshrl.u32 %v319, 7
        %v321 = vsub.s32 2, %v320
        %v322 = vrot.slane %v288, %v321
        %v323 = vmul.f32 %v317, %v322
        %v324 = vmul.f32 %v318, %v322
        %v325 = vadd.f32 %v315, %v323
        %v326 = vadd.f32 %v316, %v324
        %v327 = vld [vmem:[#allocation2 + $0x3] sm:$0xff]
        %v328 = vld [vmem:[#allocation2 + $0xb] sm:$0xff]
        %v329 = vlaneseq
        %v330 = vshrl.u32 %v329, 7
        %v331 = vsub.s32 3, %v330
        %v332 = vrot.slane %v288, %v331
        %v333 = vmul.f32 %v327, %v332
        %v334 = vmul.f32 %v328, %v332
        %v335 = vadd.f32 %v325, %v333
        %v336 = vadd.f32 %v326, %v334
        %v337 = vld [vmem:[#allocation2 + $0x4] sm:$0xff]
        %v338 = vld [vmem:[#allocation2 + $0xc] sm:$0xff]
        %v339 = vlaneseq
        %v340 = vshrl.u32 %v339, 7
        %v341 = vsub.s32 4, %v340
        %v342 = vrot.slane %v288, %v341
        %v343 = vmul.f32 %v337, %v342
        %v344 = vmul.f32 %v338, %v342
        %v345 = vadd.f32 %v335, %v343
        %v346 = vadd.f32 %v336, %v344
        %v347 = vld [vmem:[#allocation2 + $0x5] sm:$0xff]
        %v348 = vld [vmem:[#allocation2 + $0xd] sm:$0xff]
        %v349 = vlaneseq
        %v350 = vshrl.u32 %v349, 7
        %v351 = vsub.s32 5, %v350
        %v352 = vrot.slane %v288, %v351
        %v353 = vmul.f32 %v347, %v352
        %v354 = vmul.f32 %v348, %v352
        %v355 = vadd.f32 %v345, %v353
        %v356 = vadd.f32 %v346, %v354
        %v357 = vld [vmem:[#allocation2 + $0x6] sm:$0xff]
        %v358 = vld [vmem:[#allocation2 + $0xe] sm:$0xff]
        %v359 = vlaneseq
        %v360 = vshrl.u32 %v359, 7
        %v361 = vsub.s32 6, %v360
        %v362 = vrot.slane %v288, %v361
        %v363 = vmul.f32 %v357, %v362
        %v364 = vmul.f32 %v358, %v362
        %v365 = vadd.f32 %v355, %v363
        %v366 = vadd.f32 %v356, %v364
        %v367 = vlaneseq
        %v368 = vshrl.u32 %v367, 7
        %v369 = vsub.s32 7, %v368
        %v370 = vrot.slane %v288, %v369
        %v371 = vadd.f32 %v365, %v370
        %v372 = vadd.f32 %v366, %v370
        %373 = vadd.xlane.f32.xlu0 %v371
        %v374 = vpop.xlane.xlu0 %373
        %375 = vadd.xlane.f32.xlu0 %v372
        %v376 = vpop.xlane.xlu0 %375
        %v377 = vmul.f32 %v374, 0.03125
        %v378 = vmul.f32 %v376, 0.03125
        %v379 = vmul.f32 %v371, %v371
        %v380 = vmul.f32 %v372, %v372
        %381 = vadd.xlane.f32.xlu0 %v379
        %v382 = vpop.xlane.xlu0 %381
        %383 = vadd.xlane.f32.xlu0 %v380
        %v384 = vpop.xlane.xlu0 %383
        %v385 = vmul.f32 %v382, 0.03125
        %v386 = vmul.f32 %v384, 0.03125
        %v387 = vmul.f32 %v377, %v377
        %v388 = vmul.f32 %v378, %v378
        %v389 = vsub.f32 %v385, %v387
        %v390 = vsub.f32 %v386, %v388
        %v391 = vsub.f32 %v371, %v377
        %v392 = vsub.f32 %v372, %v378
        %v393 = vadd.f32 %v389, 1e-06
        %v394 = vadd.f32 %v390, 1e-06
        %v395 = vrsqrt.pop %v393
        %v396 = vrsqrt.pop %v394
        %v397 = vmul.f32 %v391, %v395
        %v398 = vmul.f32 %v392, %v396
        %v399 = vlaneseq
        %v400 = vshrl.u32 %v399, 7
        %v401 = vsub.s32 0, %v400
        %v402 = vrot.slane %v289, %v401
        %v403 = vmul.f32 %v397, %v402
        %v404 = vmul.f32 %v398, %v402
        %v405 = vlaneseq
        %v406 = vshrl.u32 %v405, 7
        %v407 = vsub.s32 1, %v406
        %v408 = vrot.slane %v289, %v407
        %v409 = vadd.f32 %v403, %v408
        %v410 = vadd.f32 %v404, %v408
        %v411 = vpack.c.bf16 %v410, %v409
        %v412 = vld [vmem:[#allocation8] sm:$0xf]
        %v413 = vld [vmem:[#allocation8 + $0x4] sm:$0xf]
        %v414 = vld [vmem:[#allocation8 + $0x8] sm:$0xf]
        %v415 = vld [vmem:[#allocation8 + $0xc] sm:$0xf]
        %v416 = vld [vmem:[#allocation8 + $0x10] sm:$0xf]
        %v417 = vld [vmem:[#allocation8 + $0x14] sm:$0xf]
        %v418 = vld [vmem:[#allocation8 + $0x18] sm:$0xf]
        %v419 = vld [vmem:[#allocation8 + $0x1c] sm:$0xf]
        %v420 = vld [vmem:[#allocation8 + $0x20] sm:$0xf]
        %v421 = vld [vmem:[#allocation8 + $0x24] sm:$0xf]
        %v422 = vld [vmem:[#allocation8 + $0x28] sm:$0xf]
        %v423 = vld [vmem:[#allocation8 + $0x2c] sm:$0xf]
        %v424 = vld [vmem:[#allocation8 + $0x30] sm:$0xf]
        %v425 = vld [vmem:[#allocation8 + $0x34] sm:$0xf]
        %v426 = vld [vmem:[#allocation8 + $0x38] sm:$0xf]
        %v427 = vld [vmem:[#allocation8 + $0x3c] sm:$0xf]
        %v428 = vlaneseq
        %v429 = vshrl.u32 %v428, 7
        %v430 = vsub.s32 0, %v429
        %v431 = vrot.slane %v290, %v430
        %v448 = vunpack.c.l.b16 %v412
        %v449 = vunpack.c.l.b16 %v413
        %v450 = vunpack.c.l.b16 %v414
        %v451 = vunpack.c.l.b16 %v415
        %v452 = vunpack.c.l.b16 %v416
        %v453 = vunpack.c.l.b16 %v417
        %v454 = vunpack.c.l.b16 %v418
        %v455 = vunpack.c.l.b16 %v419
        %v456 = vunpack.c.l.b16 %v420
        %v457 = vunpack.c.l.b16 %v421
        %v458 = vunpack.c.l.b16 %v422
        %v459 = vunpack.c.l.b16 %v423
        %v460 = vunpack.c.l.b16 %v424
        %v461 = vunpack.c.l.b16 %v425
        %v462 = vunpack.c.l.b16 %v426
        %v463 = vunpack.c.l.b16 %v427
        %v464 = vpack.c.b16 %v449, %v448
        %v465 = vpack.c.b16 %v451, %v450
        %v466 = vpack.c.b16 %v453, %v452
        %v467 = vpack.c.b16 %v455, %v454
        %v468 = vpack.c.b16 %v457, %v456
        %v469 = vpack.c.b16 %v459, %v458
        %v470 = vpack.c.b16 %v461, %v460
        %v471 = vpack.c.b16 %v463, %v462
        %480 = vmatprep.subr.bf16.mxu0 0
        %481 = vmatpush1.bf16.msra.mxu0 %v464
        %482 = vmatprep.subr.bf16.mxu0 0
        %483 = vmatpush1.bf16.msra.mxu0 %v465
        %484 = vmatprep.subr.bf16.mxu0 0
        %485 = vmatpush1.bf16.msra.mxu0 %v466
        %486 = vmatprep.subr.bf16.mxu0 0
        %487 = vmatpush1.bf16.msra.mxu0 %v467
        %488 = vmatprep.subr.bf16.mxu0 0
        %489 = vmatpush1.bf16.msra.mxu0 %v468
        %490 = vmatprep.subr.bf16.mxu0 0
        %491 = vmatpush1.bf16.msra.mxu0 %v469
        %492 = vmatprep.subr.bf16.mxu0 0
        %493 = vmatpush1.bf16.msra.mxu0 %v470
        %494 = vmatprep.subr.bf16.mxu0 0
        %495 = vmatpush1.bf16.msra.mxu0 %v471
        %496 = vmatprep.subr.bf16.mxu0 0
        %497 = vmatpush1.bf16.msra.mxu0 0
        %498 = vmatprep.subr.bf16.mxu0 0
        %499 = vmatpush1.bf16.msra.mxu0 0
        %500 = vmatprep.subr.bf16.mxu0 0
        %501 = vmatpush1.bf16.msra.mxu0 0
        %502 = vmatprep.subr.bf16.mxu0 0
        %503 = vmatpush1.bf16.msra.mxu0 0
        %504 = vmatprep.subr.bf16.mxu0 0
        %505 = vmatpush1.bf16.msra.mxu0 0
        %506 = vmatprep.subr.bf16.mxu0 0
        %507 = vmatpush1.bf16.msra.mxu0 0
        %508 = vmatprep.subr.bf16.mxu0 0
        %509 = vmatpush1.bf16.msra.mxu0 0
        %510 = vmatprep.subr.bf16.mxu0 0
        %511 = vmatpush1.bf16.msra.mxu0 0
        %512 = vmatprep.mubr.bf16.mxu0 0
        %513 = vmatmul.mubr.bf16.gmra.mrb[0].mxu0 %v411
        %v514 = vpop.f32.mrb[0].mxu0
        %v515 = vadd.f32 %v431, %v514
        %v516 = vpop.f32.mrb[0].mxu0
        %v517 = vpop.f32.mrb[0].mxu0
        %v518 = vadd.f32 %v431, %v517
        %v519 = vpop.f32.mrb[0].mxu0
        %520 = vdwg.mxu0
        %v521 = vmul.f32 %v515, 0.5
        %v522 = vmul.f32 %v518, 0.5
        %v523 = vmul.f32 %v515, 0.70710677
        %v524 = vmul.f32 %v518, 0.70710677
        %v525 = verf.f32.pop %v523
        %v526 = verf.f32.pop %v524
        %v527 = vadd.f32 %v525, 1.0
        %v528 = vadd.f32 %v526, 1.0
        %v529 = vmul.f32 %v521, %v527
        %v530 = vmul.f32 %v522, %v528
        %v531 = vmul.f32 %v529, %v529
        %v532 = vmul.f32 %v530, %v530
        %v533 = vadd.f32 %v531, %v532
        %v534 = vrot.slane %v533, 4
        %v535 = vadd.f32 %v533, %v534
        %v536 = vrot.slane %v535, 2
        %v537 = vadd.f32 %v535, %v536
        %v538 = vrot.slane %v537, 1
        %v539 = vadd.f32 %v537, %v538
        %v540 = vrsqrt.pop %v539
        %v541 = vmul.f32 %v539, %v540
        %vm542 = vcmp.eq.f32.partialorder %v539, inf
        %v543 = vsel %vm542, %v539, %v541
        %vm544 = vcmp.eq.f32.partialorder %v539, 0.0
        %v545 = vand.u32 %v539, 2147483648
        %v546 = vsel %vm544, %v545, %v543
        %v547 = vpack.c.bf16 %v530, %v529
        %548 = vadd.xlane.f32.xlu0 %v546
        %v549 = vpop.xlane.xlu0 %548
        %v550 = vmul.f32 %v549, 0.015625
        %v551 = vadd.f32 %v550, 1e-06
        %v552 = vrcp.pop %v551
        %v553 = vmul.f32 %v546, %v552
        %v554 = vmul.f32 %v290, %v553
        %v555 = vadd.f32 %v554, 1.0
        %v556 = vpack.c.bf16 %v555, %v555
        %v557 = vpack.c.bf16 %v290, %v290
        %v559 = vshrl.u32 %v556, 16
        %v560 = vpack.i.b16 %v559, %v559
        %v562 = vlaneseq
        %v563 = vshrl.u32 %v562, 7
        %v564 = vsub.s32 0, %v563
        %v565 = vrot.slane %v560, %v564
        %v566 = vmul.bf16 %v547, %v565
        %v568 = vpack.i.b16 %v557, %v557
        %v570 = vlaneseq
        %v571 = vshrl.u32 %v570, 7
        %v572 = vsub.s32 1, %v571
        %v573 = vrot.slane %v568, %v572
        %v574 = vadd.bf16 %v566, %v573
        %v575 = vld [vmem:[#allocation9] sm:$0xf]
        %v576 = vld [vmem:[#allocation9 + $0x4] sm:$0xf]
        %v577 = vld [vmem:[#allocation9 + $0x8] sm:$0xf]
        %v578 = vld [vmem:[#allocation9 + $0xc] sm:$0xf]
        %v579 = vld [vmem:[#allocation9 + $0x10] sm:$0xf]
        %v580 = vld [vmem:[#allocation9 + $0x14] sm:$0xf]
        %v581 = vld [vmem:[#allocation9 + $0x18] sm:$0xf]
        %v582 = vld [vmem:[#allocation9 + $0x1c] sm:$0xf]
        %v583 = vld [vmem:[#allocation9 + $0x20] sm:$0xf]
        %v584 = vld [vmem:[#allocation9 + $0x24] sm:$0xf]
        %v585 = vld [vmem:[#allocation9 + $0x28] sm:$0xf]
        %v586 = vld [vmem:[#allocation9 + $0x2c] sm:$0xf]
        %v587 = vld [vmem:[#allocation9 + $0x30] sm:$0xf]
        %v588 = vld [vmem:[#allocation9 + $0x34] sm:$0xf]
        %v589 = vld [vmem:[#allocation9 + $0x38] sm:$0xf]
        %v590 = vld [vmem:[#allocation9 + $0x3c] sm:$0xf]
        %v607 = vunpack.c.l.b16 %v575
        %v608 = vunpack.c.l.b16 %v576
        %v609 = vunpack.c.l.b16 %v577
        %v610 = vunpack.c.l.b16 %v578
        %v611 = vunpack.c.l.b16 %v579
        %v612 = vunpack.c.l.b16 %v580
        %v613 = vunpack.c.l.b16 %v581
        %v614 = vunpack.c.l.b16 %v582
        %v615 = vunpack.c.l.b16 %v583
        %v616 = vunpack.c.l.b16 %v584
        %v617 = vunpack.c.l.b16 %v585
        %v618 = vunpack.c.l.b16 %v586
        %v619 = vunpack.c.l.b16 %v587
        %v620 = vunpack.c.l.b16 %v588
        %v621 = vunpack.c.l.b16 %v589
        %v622 = vunpack.c.l.b16 %v590
        %v623 = vpack.c.b16 %v608, %v607
        %v624 = vpack.c.b16 %v610, %v609
        %v625 = vpack.c.b16 %v612, %v611
        %v626 = vpack.c.b16 %v614, %v613
        %v627 = vpack.c.b16 %v616, %v615
        %v628 = vpack.c.b16 %v618, %v617
        %v629 = vpack.c.b16 %v620, %v619
        %v630 = vpack.c.b16 %v622, %v621
        %639 = vmatprep.subr.bf16.mxu0 0
        %640 = vmatpush1.bf16.msra.mxu0 %v623
        %641 = vmatprep.subr.bf16.mxu0 0
        %642 = vmatpush1.bf16.msra.mxu0 %v624
        %643 = vmatprep.subr.bf16.mxu0 0
        %644 = vmatpush1.bf16.msra.mxu0 %v625
        %645 = vmatprep.subr.bf16.mxu0 0
        %646 = vmatpush1.bf16.msra.mxu0 %v626
        %647 = vmatprep.subr.bf16.mxu0 0
        %648 = vmatpush1.bf16.msra.mxu0 %v627
        %649 = vmatprep.subr.bf16.mxu0 0
        %650 = vmatpush1.bf16.msra.mxu0 %v628
        %651 = vmatprep.subr.bf16.mxu0 0
        %652 = vmatpush1.bf16.msra.mxu0 %v629
        %653 = vmatprep.subr.bf16.mxu0 0
        %654 = vmatpush1.bf16.msra.mxu0 %v630
        %655 = vmatprep.subr.bf16.mxu0 0
        %656 = vmatpush1.bf16.msra.mxu0 0
        %657 = vmatprep.subr.bf16.mxu0 0
        %658 = vmatpush1.bf16.msra.mxu0 0
        %659 = vmatprep.subr.bf16.mxu0 0
        %660 = vmatpush1.bf16.msra.mxu0 0
        %661 = vmatprep.subr.bf16.mxu0 0
        %662 = vmatpush1.bf16.msra.mxu0 0
        %663 = vmatprep.subr.bf16.mxu0 0
        %664 = vmatpush1.bf16.msra.mxu0 0
        %665 = vmatprep.subr.bf16.mxu0 0
        %666 = vmatpush1.bf16.msra.mxu0 0
        %667 = vmatprep.subr.bf16.mxu0 0
        %668 = vmatpush1.bf16.msra.mxu0 0
        %669 = vmatprep.subr.bf16.mxu0 0
        %670 = vmatpush1.bf16.msra.mxu0 0
        %671 = vmatprep.mubr.bf16.mxu0 0
        %672 = vmatmul.mubr.bf16.gmra.mrb[0].mxu0 %v574
        %v673 = vpop.f32.mrb[0].mxu0
        %v674 = vadd.f32 0.0, %v673
        %v675 = vpop.f32.mrb[0].mxu0
        %v676 = vpop.f32.mrb[0].mxu0
        %v677 = vadd.f32 0.0, %v676
        %v678 = vpop.f32.mrb[0].mxu0
        %679 = vdwg.mxu0
        %v680 = vlaneseq
        %v681 = vshrl.u32 %v680, 7
        %v682 = vsub.s32 2, %v681
        %v683 = vrot.slane %v289, %v682
        %v684 = vadd.f32 %v674, %v683
        %v685 = vadd.f32 %v677, %v683
        %v686 = vld [vmem:[%s248] sm:$0xff]
        %v687 = vld [vmem:[%s248 + $0x8] sm:$0xff]
        %v688 = vadd.f32 %v684, %v686
        %v689 = vadd.f32 %v685, %v687
        %690 = vst [vmem:[%s286] sm:$0xff] %v688
        %691 = vst [vmem:[%s286 + $0x8] sm:$0xff] %v689
        %s692 = sand.u32 %s142, 1
        %s693 = scalar_lea.sflag [#allocation5], %s692
        %s694 = sand.u32 %s142, 1
        %s695 = smul.addr %s694, 16
        %s696 = scalar_lea.vmem [#allocation11], %s695
        // Predicated region
        $region57: #{tpu_custom_call.1} parent=39 // pred_check
          %p697 = pneg %p152
        $region58: #{tpu_custom_call.1} parent=39 // pred_check_branch
          %699 = sbr.rel (%p697) target = $region60
        $region59: #{tpu_custom_call.1} parent=39 // pred_region
          %s701 = ssub.s32 256, 256
          %702 = vsyncadd %s693, %s701
          %s703 = smul.addr %s24, 2
          %s704 = smul.addr %s703, 128
          %s705 = scalar_lea.hbm %s5, %s704
          %s706 = sshll.u32 %s696, 4
          %s707 = int_to_ptr.vmem [resolvable:$true] %s706
          %712 = dma.vmem_to_hbm [thread:$0]  %s707, 256, %s705, %s693, 128, 128, 8
        $region60: #{tpu_custom_call.1} parent=39 // pred_fallthru
          _
      $region40: #{tpu_custom_call.1} parent=5 // pred_fallthru
        _
      %p713 = scmp.le.s32.totalorder 2, %s19
      // Predicated region
      $region61: #{tpu_custom_call.1} parent=5 // pred_check
        %p714 = pneg %p713
      $region62: #{tpu_custom_call.1} parent=5 // pred_check_branch
        %716 = sbr.rel (%p714) target = $region64
      $region63: #{tpu_custom_call.1} parent=5 // pred_region
        %s717 = ssub.s32 %s19, 2
        // Predicated region
        $region65: #{tpu_custom_call.1} parent=63 // pred_check
          %p718 = pneg %p158
        $region66: #{tpu_custom_call.1} parent=63 // pred_check_branch
          %720 = sbr.rel (%p718) target = $region68
        $region67: #{tpu_custom_call.1} parent=63 // pred_region
          %s721 = sand.u32 %s143, 1
          %s722 = scalar_lea.sflag [#allocation5], %s721
          %s723 = sand.u32 %s143, 1
          %s724 = smul.addr %s723, 16
          %s725 = scalar_lea.vmem [#allocation11], %s724
          %726 = dma.done %s722, 256
        $region68: #{tpu_custom_call.1} parent=63 // pred_fallthru
          _
      $region64: #{tpu_custom_call.1} parent=5 // pred_fallthru
        _
    $region6: #{tpu_custom_call.1} parent=1 // loop_footer
      %s23 = sadd.s32 1, %s19
    $region7: #{tpu_custom_call.1} parent=1 // loop_footer_branch
      %18 = sbr.rel target = $region3
    $region8: #{tpu_custom_call.1} parent=1 // loop_exit
      _
    %727 = vsyncpa [#allocation4], 1
    %s728 = scalar_lea.sflag [#allocation4], 1
    %729 = vsyncpa %s728, 1
    %730 = vsyncpa [#allocation7], 1
    %731 = vsyncpa [#allocation10], 1
    %732 = vsyncpa [#allocation5], 1
    %s733 = scalar_lea.sflag [#allocation5], 1
    %734 = vsyncpa %s733, 1

// kernel: tpu_custom_call.1
$region0: #{tpu_custom_call.1}
  #allocation0 [shape = 'u32[]', space=smem, size = 0x4, offset = 0x4, fixed_abs, tag = 'smem constant byte address 0x4 - core index']
  #allocation1 [shape = 'u32[144,128]{1,0:T(1,128)}', space=vmem, size = 0x12000, scoped, tag = 'internal scratch']
  #allocation2 [shape = 'f32[1,22,128]{2,1,0:T(8,128)}', space=vmem, size = 0x3000, scoped, tag = 'scratch operand']
  %s0 = inlined_call_operand.hbm [shape: f32[2,16,128], index: 0, kind: input, shape index: {}]
  %s1 = inlined_call_operand.hbm [shape: f32[11,128], index: 1, kind: input, shape index: {}]
  %s2 = inlined_call_operand.vmem [shape: f32[3,128], index: 2, kind: input, shape index: {}]
  %s3 = inlined_call_operand.hbm [shape: bf16[128,128], index: 3, kind: input, shape index: {}]
  %s4 = inlined_call_operand.hbm [shape: bf16[128,128], index: 4, kind: input, shape index: {}]
  %s5 = inlined_call_operand.hbm [shape: f32[2,16,128], index: 5, kind: output, shape index: {}]
  %s6 = sld [smem:[#allocation0]]
  $region69: #{tpu_custom_call.1} parent=0
    _
  %s8 = ssub.s32 1, %s6
  %s9 = scalar_select 0, %s8, %s6
  $region1: #{tpu_custom_call.1} parent=0
    #allocation3 [shape = 'u8[16384]{0}', space=vmem, size = 0x4000, scoped, tag = 'input window, operand 0']
    #allocation4 [shape = 's32[2]{0}', space=sflag, size = 0x8, scoped, tag = 'scoped memory for tpu_custom_call.1']
    #allocation5 [shape = 's32[2]{0}', space=sflag, size = 0x8, scoped, tag = 'scoped memory for tpu_custom_call.1']
    #allocation6 [shape = 'u8[8192]{0}', space=vmem, size = 0x2000, scoped, tag = 'input window, operand 1, single buffered']
    #allocation7 [shape = 's32[1]{0}', space=sflag, size = 0x4, scoped, tag = 'scoped memory for tpu_custom_call.1']
    #allocation8 [shape = 'u8[32768]{0}', space=vmem, size = 0x8000, scoped, tag = 'input window, operand 3, single buffered']
    #allocation9 [shape = 'u8[32768]{0}', space=vmem, size = 0x8000, scoped, tag = 'input window, operand 4, single buffered']
    #allocation10 [shape = 's32[1]{0}', space=sflag, size = 0x4, scoped, tag = 'scoped memory for tpu_custom_call.1']
    #allocation11 [shape = 'u8[16384]{0}', space=vmem, size = 0x4000, scoped, tag = 'output window, operand 0']
    %10 = vsyncpa [#allocation4], 0
    %s11 = scalar_lea.sflag [#allocation4], 1
    %12 = vsyncpa %s11, 0
    %13 = vsyncpa [#allocation7], 0
    %14 = vsyncpa [#allocation10], 0
    %15 = vsyncpa [#allocation5], 0
    %s16 = scalar_lea.sflag [#allocation5], 1
    %17 = vsyncpa %s16, 0
    loop: start=0, step=1, limit=4
    $region2: #{tpu_custom_call.1} parent=1 // loop_pre_header
      _
    $region3: #{tpu_custom_call.1} parent=1 // loop_header
      %s19 = sphi 0, %s23
      %p20 = scmp.ge.s32.totalorder %s19, 4
      %s29 = sphi 0, %s31
      %s32 = sphi 0, %s29
      %s33 = sphi 0, %s32
      %s49 = sphi 0, %s33
      %s53 = sphi 0, %s53
      %s55 = sphi 0, %s53
      %s56 = sphi 0, %s55
      %s70 = sphi 0, %s56
      %s74 = sphi 0, %s74
      %s76 = sphi 0, %s74
      %s77 = sphi 0, %s76
      %s91 = sphi 0, %s77
      %s95 = sphi 0, %s95
      %s97 = sphi 0, %s95
      %s98 = sphi 0, %s97
      %s112 = sphi 0, %s98
      %s116 = sphi 0, %s116
      %s118 = sphi 0, %s116
      %s119 = sphi 0, %s118
      %s133 = sphi 0, %s119
      %s139 = sphi 0, %s141
      %s142 = sphi 0, %s139
      %s143 = sphi 0, %s142
      %s159 = sphi 0, %s143
    $region4: #{tpu_custom_call.1} parent=1 // loop_header_branch
      %22 = sbr.rel (%p20) target = $region8
    $region5: #{tpu_custom_call.1} parent=1 // loop_body
      %s24 = ssub.s32 %s19, 1
      %s25 = ssub.s32 %s19, 2
      %s26 = sadd.s32 %s19, 1
      %s27 = ssub.s32 %s19, %s26
      %p28 = scmp.eq.s32.totalorder %s27, 0
      %s30 = sadd.s32 %s29, 1
      %s31 = scalar_select %p28, %s29, %s30
      %p34 = pneg %p28
      %p35 = scmp.eq.s32.totalorder %s19, 1
      %p36 = por %p34, %p35
      %p37 = scmp.ne.s32.totalorder %s29, %s32
      %p38 = scmp.eq.s32.totalorder %s19, 0
      %p39 = por %p37, %p38
      %p40 = scmp.ne.s32.totalorder %s29, %s32
      %p41 = scmp.eq.s32.totalorder %s24, 1
      %p42 = por %p40, %p41
      %p43 = scmp.ne.s32.totalorder %s32, %s33
      %p44 = scmp.eq.s32.totalorder %s24, 0
      %p45 = por %p43, %p44
      %p46 = scmp.ne.s32.totalorder %s32, %s33
      %p47 = scmp.eq.s32.totalorder %s25, 1
      %p48 = por %p46, %p47
      %p50 = scmp.ne.s32.totalorder %s33, %s49
      %p51 = scmp.eq.s32.totalorder %s25, 0
      %p52 = por %p50, %p51
      %s54 = sadd.s32 %s53, 1
      %p57 = scmp.eq.s32.totalorder %s19, 1
      %p58 = scmp.ne.s32.totalorder %s53, %s55
      %p59 = scmp.eq.s32.totalorder %s19, 0
      %p60 = por %p58, %p59
      %p61 = scmp.ne.s32.totalorder %s53, %s55
      %p62 = scmp.eq.s32.totalorder %s24, 1
      %p63 = por %p61, %p62
      %p64 = scmp.ne.s32.totalorder %s55, %s56
      %p65 = scmp.eq.s32.totalorder %s24, 0
      %p66 = por %p64, %p65
      %p67 = scmp.ne.s32.totalorder %s55, %s56
      %p68 = scmp.eq.s32.totalorder %s25, 1
      %p69 = por %p67, %p68
      %p71 = scmp.ne.s32.totalorder %s56, %s70
      %p72 = scmp.eq.s32.totalorder %s25, 0
      %p73 = por %p71, %p72
      %s75 = sadd.s32 %s74, 1
      %p78 = scmp.eq.s32.totalorder %s19, 1
      %p79 = scmp.ne.s32.totalorder %s74, %s76
      %p80 = scmp.eq.s32.totalorder %s19, 0
      %p81 = por %p79, %p80
      %p82 = scmp.ne.s32.totalorder %s74, %s76
      %p83 = scmp.eq.s32.totalorder %s24, 1
      %p84 = por %p82, %p83
      %p85 = scmp.ne.s32.totalorder %s76, %s77
      %p86 = scmp.eq.s32.totalorder %s24, 0
      %p87 = por %p85, %p86
      %p88 = scmp.ne.s32.totalorder %s76, %s77
      %p89 = scmp.eq.s32.totalorder %s25, 1
      %p90 = por %p88, %p89
      %p92 = scmp.ne.s32.totalorder %s77, %s91
      %p93 = scmp.eq.s32.totalorder %s25, 0
      %p94 = por %p92, %p93
      %s96 = sadd.s32 %s95, 1
      %p99 = scmp.eq.s32.totalorder %s19, 1
      %p100 = scmp.ne.s32.totalorder %s95, %s97
      %p101 = scmp.eq.s32.totalorder %s19, 0
      %p102 = por %p100, %p101
      %p103 = scmp.ne.s32.totalorder %s95, %s97
      %p104 = scmp.eq.s32.totalorder %s24, 1
      %p105 = por %p103, %p104
      %p106 = scmp.ne.s32.totalorder %s97, %s98
      %p107 = scmp.eq.s32.totalorder %s24, 0
      %p108 = por %p106, %p107
      %p109 = scmp.ne.s32.totalorder %s97, %s98
      %p110 = scmp.eq.s32.totalorder %s25, 1
      %p111 = por %p109, %p110
      %p113 = scmp.ne.s32.totalorder %s98, %s112
      %p114 = scmp.eq.s32.totalorder %s25, 0
      %p115 = por %p113, %p114
      %s117 = sadd.s32 %s116, 1
      %p120 = scmp.eq.s32.totalorder %s19, 1
      %p121 = scmp.ne.s32.totalorder %s116, %s118
      %p122 = scmp.eq.s32.totalorder %s19, 0
      %p123 = por %p121, %p122
      %p124 = scmp.ne.s32.totalorder %s116, %s118
      %p125 = scmp.eq.s32.totalorder %s24, 1
      %p126 = por %p124, %p125
      %p127 = scmp.ne.s32.totalorder %s118, %s119
      %p128 = scmp.eq.s32.totalorder %s24, 0
      %p129 = por %p127, %p128
      %p130 = scmp.ne.s32.totalorder %s118, %s119
      %p131 = scmp.eq.s32.totalorder %s25, 1
      %p132 = por %p130, %p131
      %p134 = scmp.ne.s32.totalorder %s119, %s133
      %p135 = scmp.eq.s32.totalorder %s25, 0
      %p136 = por %p134, %p135
      %s137 = ssub.s32 %s19, %s26
      %p138 = scmp.eq.s32.totalorder %s137, 0
      %s140 = sadd.s32 %s139, 1
      %s141 = scalar_select %p138, %s139, %s140
      %p144 = pneg %p138
      %p145 = scmp.eq.s32.totalorder %s19, 1
      %p146 = por %p144, %p145
      %p147 = scmp.ne.s32.totalorder %s139, %s142
      %p148 = scmp.eq.s32.totalorder %s19, 0
      %p149 = por %p147, %p148
      %p150 = scmp.ne.s32.totalorder %s139, %s142
      %p151 = scmp.eq.s32.totalorder %s24, 1
      %p152 = por %p150, %p151
      %p153 = scmp.ne.s32.totalorder %s142, %s143
      %p154 = scmp.eq.s32.totalorder %s24, 0
      %p155 = por %p153, %p154
      %p156 = scmp.ne.s32.totalorder %s142, %s143
      %p157 = scmp.eq.s32.totalorder %s25, 1
      %p158 = por %p156, %p157
      %p160 = scmp.ne.s32.totalorder %s143, %s159
      %p161 = scmp.eq.s32.totalorder %s25, 0
      %p162 = por %p160, %p161
      %p163 = scmp.le.s32.totalorder 1, %s19
      %p164 = scmp.lt.s32.totalorder %s19, 3
      %p165 = pnand %p163, %p164
      %p166 = pneg %p165
      // Predicated region
      $region9: #{tpu_custom_call.1} parent=5 // pred_check
        _
      $region10: #{tpu_custom_call.1} parent=5 // pred_check_branch
        %168 = sbr.rel (%p165) target = $region12
      $region11: #{tpu_custom_call.1} parent=5 // pred_region
        %s169 = ssub.s32 %s19, 1
        // Predicated region
        $region13: #{tpu_custom_call.1} parent=11 // pred_check
          %p170 = pneg %p66
        $region14: #{tpu_custom_call.1} parent=11 // pred_check_branch
          %172 = sbr.rel (%p170) target = $region16
        $region15: #{tpu_custom_call.1} parent=11 // pred_region
          %s174 = ssub.s32 256, 256
          %175 = vsyncadd [#allocation7], %s174
          %s176 = sshll.u32 [#allocation6], 4
          %s177 = int_to_ptr.vmem [resolvable:$true] %s176
          %182 = dma.hbm_to_vmem [thread:$0]  %s1, 256, %s177, [#allocation7], 128, 128, 8
        $region16: #{tpu_custom_call.1} parent=11 // pred_fallthru
          _
        // Predicated region
        $region17: #{tpu_custom_call.1} parent=11 // pred_check
          %p183 = pneg %p87
        $region18: #{tpu_custom_call.1} parent=11 // pred_check_branch
          %185 = sbr.rel (%p183) target = $region20
        $region19: #{tpu_custom_call.1} parent=11 // pred_region
          _
        $region20: #{tpu_custom_call.1} parent=11 // pred_fallthru
          _
        // Predicated region
        $region21: #{tpu_custom_call.1} parent=11 // pred_check
          %p186 = pneg %p108
        $region22: #{tpu_custom_call.1} parent=11 // pred_check_branch
          %188 = sbr.rel (%p186) target = $region24
        $region23: #{tpu_custom_call.1} parent=11 // pred_region
          %s190 = ssub.s32 1024, 1024
          %191 = vsyncadd [#allocation7], %s190
          %s192 = sshll.u32 [#allocation8], 4
          %s193 = int_to_ptr.vmem [resolvable:$true] %s192
          %198 = dma.hbm_to_vmem [thread:$0]  %s3, 1024, %s193, [#allocation7], 64, 64, 4
        $region24: #{tpu_custom_call.1} parent=11 // pred_fallthru
          _
        // Predicated region
        $region25: #{tpu_custom_call.1} parent=11 // pred_check
          %p199 = pneg %p129
        $region26: #{tpu_custom_call.1} parent=11 // pred_check_branch
          %201 = sbr.rel (%p199) target = $region28
        $region27: #{tpu_custom_call.1} parent=11 // pred_region
          %s203 = ssub.s32 1024, 1024
          %204 = vsyncadd [#allocation10], %s203
          %s205 = sshll.u32 [#allocation9], 4
          %s206 = int_to_ptr.vmem [resolvable:$true] %s205
          %211 = dma.hbm_to_vmem [thread:$0]  %s4, 1024, %s206, [#allocation10], 64, 64, 4
        $region28: #{tpu_custom_call.1} parent=11 // pred_fallthru
          _
      $region12: #{tpu_custom_call.1} parent=5 // pred_fallthru
        _
      %p212 = scmp.lt.s32.totalorder %s19, 2
      // Predicated region
      $region29: #{tpu_custom_call.1} parent=5 // pred_check
        %p213 = pneg %p212
      $region30: #{tpu_custom_call.1} parent=5 // pred_check_branch
        %215 = sbr.rel (%p213) target = $region32
      $region31: #{tpu_custom_call.1} parent=5 // pred_region
        // Predicated region
        $region33: #{tpu_custom_call.1} parent=31 // pred_check
          %p216 = pneg %p39
        $region34: #{tpu_custom_call.1} parent=31 // pred_check_branch
          %218 = sbr.rel (%p216) target = $region36
        $region35: #{tpu_custom_call.1} parent=31 // pred_region
          %s219 = sand.u32 %s29, 1
          %s220 = scalar_lea.sflag [#allocation4], %s219
          %s221 = sand.u32 %s29, 1
          %s222 = smul.addr %s221, 16
          %s223 = scalar_lea.vmem [#allocation3], %s222
          %s225 = ssub.s32 256, 256
          %226 = vsyncadd %s220, %s225
          %s227 = smul.addr %s19, 2
          %s228 = smul.addr %s227, 128
          %s229 = scalar_lea.hbm %s0, %s228
          %s230 = sshll.u32 %s223, 4
          %s231 = int_to_ptr.vmem [resolvable:$true] %s230
          %236 = dma.hbm_to_vmem [thread:$0]  %s229, 256, %s231, %s220, 128, 128, 8
        $region36: #{tpu_custom_call.1} parent=31 // pred_fallthru
          _
      $region32: #{tpu_custom_call.1} parent=5 // pred_fallthru
        _
      %p237 = scmp.le.s32.totalorder 1, %s19
      %p238 = scmp.lt.s32.totalorder %s19, 3
      %p239 = pnand %p237, %p238
      %p240 = pneg %p239
      // Predicated region
      $region37: #{tpu_custom_call.1} parent=5 // pred_check
        _
      $region38: #{tpu_custom_call.1} parent=5 // pred_check_branch
        %242 = sbr.rel (%p239) target = $region40
      $region39: #{tpu_custom_call.1} parent=5 // pred_region
        %s243 = ssub.s32 %s19, 1
        %s244 = sand.u32 %s32, 1
        %s245 = scalar_lea.sflag [#allocation4], %s244
        %s246 = sand.u32 %s32, 1
        %s247 = smul.addr %s246, 16
        %s248 = scalar_lea.vmem [#allocation3], %s247
        // Predicated region
        $region41: #{tpu_custom_call.1} parent=39 // pred_check
          %p249 = pneg %p45
        $region42: #{tpu_custom_call.1} parent=39 // pred_check_branch
          %251 = sbr.rel (%p249) target = $region44
        $region43: #{tpu_custom_call.1} parent=39 // pred_region
          %252 = dma.done %s245, 256
        $region44: #{tpu_custom_call.1} parent=39 // pred_fallthru
          _
        // Predicated region
        $region45: #{tpu_custom_call.1} parent=39 // pred_check
          %p253 = pneg %p66
        $region46: #{tpu_custom_call.1} parent=39 // pred_check_branch
          %255 = sbr.rel (%p253) target = $region48
        $region47: #{tpu_custom_call.1} parent=39 // pred_region
          %256 = dma.done [#allocation7], 256
        $region48: #{tpu_custom_call.1} parent=39 // pred_fallthru
          _
        // Predicated region
        $region49: #{tpu_custom_call.1} parent=39 // pred_check
          %p257 = pneg %p108
        $region50: #{tpu_custom_call.1} parent=39 // pred_check_branch
          %259 = sbr.rel (%p257) target = $region52
        $region51: #{tpu_custom_call.1} parent=39 // pred_region
          %260 = dma.done [#allocation7], 1024
        $region52: #{tpu_custom_call.1} parent=39 // pred_fallthru
          _
        // Predicated region
        $region53: #{tpu_custom_call.1} parent=39 // pred_check
          %p261 = pneg %p129
        $region54: #{tpu_custom_call.1} parent=39 // pred_check_branch
          %263 = sbr.rel (%p261) target = $region56
        $region55: #{tpu_custom_call.1} parent=39 // pred_region
          %264 = dma.done [#allocation10], 1024
        $region56: #{tpu_custom_call.1} parent=39 // pred_fallthru
          _
        %s265 = sand.u32 %s32, 1
        %s266 = scalar_lea.sflag [#allocation4], %s265
        %s267 = sand.u32 %s32, 1
        %s268 = smul.addr %s267, 16
        %s269 = scalar_lea.vmem [#allocation3], %s268
        %p270 = pneg %p45
        %p271 = pneg %p42
        %p272 = pneg %p66
        %p273 = pneg %p63
        %p274 = pneg %p87
        %p275 = pneg %p84
        %p276 = pneg %p108
        %p277 = pneg %p105
        %p278 = pneg %p129
        %p279 = pneg %p126
        %p280 = pneg %p155
        %p281 = pneg %p152
        %s282 = sand.u32 %s142, 1
        %s283 = scalar_lea.sflag [#allocation5], %s282
        %s284 = sand.u32 %s142, 1
        %s285 = smul.addr %s284, 16
        %s286 = scalar_lea.vmem [#allocation11], %s285
        %v288 = vld [vmem:[#allocation6] sm:$0xff]
        %v289 = vld [vmem:[#allocation6 + $0x8] sm:$0x7]
        %v290 = vld [vmem:[%s2] sm:$0x7]
        %291 = vst [vmem:[#allocation2] sm:$0x7] 0.0
        %292 = vst [vmem:[#allocation2 + $0x13] sm:$0x7] 0.0
        %v293 = vld [vmem:[%s248] sm:$0xff]
        %v294 = vld [vmem:[%s248 + $0x8] sm:$0xff]
        %295 = vst [vmem:[#allocation2 + $0x3] sm:$0xff] %v293
        %296 = vst [vmem:[#allocation2 + $0xb] sm:$0xff] %v294
        %v297 = vld [vmem:[#allocation2] sm:$0xff]
        %v298 = vld [vmem:[#allocation2 + $0x8] sm:$0xff]
        %v299 = vlaneseq
        %v300 = vshrl.u32 %v299, 7
        %v301 = vsub.s32 0, %v300
        %v302 = vrot.slane %v288, %v301
        %v303 = vmul.f32 %v297, %v302
        %v304 = vmul.f32 %v298, %v302
        %v305 = vadd.f32 %v303, 0.0
        %v306 = vadd.f32 %v304, 0.0
        %v307 = vld [vmem:[#allocation2 + $0x1] sm:$0xff]
        %v308 = vld [vmem:[#allocation2 + $0x9] sm:$0xff]
        %v309 = vlaneseq
        %v310 = vshrl.u32 %v309, 7
        %v311 = vsub.s32 1, %v310
        %v312 = vrot.slane %v288, %v311
        %v313 = vmul.f32 %v307, %v312
        %v314 = vmul.f32 %v308, %v312
        %v315 = vadd.f32 %v305, %v313
        %v316 = vadd.f32 %v306, %v314
        %v317 = vld [vmem:[#allocation2 + $0x2] sm:$0xff]
        %v318 = vld [vmem:[#allocation2 + $0xa] sm:$0xff]
        %v319 = vlaneseq
        %v320 = vshrl.u32 %v319, 7
        %v321 = vsub.s32 2, %v320
        %v322 = vrot.slane %v288, %v321
        %v323 = vmul.f32 %v317, %v322
        %v324 = vmul.f32 %v318, %v322
        %v325 = vadd.f32 %v315, %v323
        %v326 = vadd.f32 %v316, %v324
        %v327 = vld [vmem:[#allocation2 + $0x3] sm:$0xff]
        %v328 = vld [vmem:[#allocation2 + $0xb] sm:$0xff]
        %v329 = vlaneseq
        %v330 = vshrl.u32 %v329, 7
        %v331 = vsub.s32 3, %v330
        %v332 = vrot.slane %v288, %v331
        %v333 = vmul.f32 %v327, %v332
        %v334 = vmul.f32 %v328, %v332
        %v335 = vadd.f32 %v325, %v333
        %v336 = vadd.f32 %v326, %v334
        %v337 = vld [vmem:[#allocation2 + $0x4] sm:$0xff]
        %v338 = vld [vmem:[#allocation2 + $0xc] sm:$0xff]
        %v339 = vlaneseq
        %v340 = vshrl.u32 %v339, 7
        %v341 = vsub.s32 4, %v340
        %v342 = vrot.slane %v288, %v341
        %v343 = vmul.f32 %v337, %v342
        %v344 = vmul.f32 %v338, %v342
        %v345 = vadd.f32 %v335, %v343
        %v346 = vadd.f32 %v336, %v344
        %v347 = vld [vmem:[#allocation2 + $0x5] sm:$0xff]
        %v348 = vld [vmem:[#allocation2 + $0xd] sm:$0xff]
        %v349 = vlaneseq
        %v350 = vshrl.u32 %v349, 7
        %v351 = vsub.s32 5, %v350
        %v352 = vrot.slane %v288, %v351
        %v353 = vmul.f32 %v347, %v352
        %v354 = vmul.f32 %v348, %v352
        %v355 = vadd.f32 %v345, %v353
        %v356 = vadd.f32 %v346, %v354
        %v357 = vld [vmem:[#allocation2 + $0x6] sm:$0xff]
        %v358 = vld [vmem:[#allocation2 + $0xe] sm:$0xff]
        %v359 = vlaneseq
        %v360 = vshrl.u32 %v359, 7
        %v361 = vsub.s32 6, %v360
        %v362 = vrot.slane %v288, %v361
        %v363 = vmul.f32 %v357, %v362
        %v364 = vmul.f32 %v358, %v362
        %v365 = vadd.f32 %v355, %v363
        %v366 = vadd.f32 %v356, %v364
        %v367 = vlaneseq
        %v368 = vshrl.u32 %v367, 7
        %v369 = vsub.s32 7, %v368
        %v370 = vrot.slane %v288, %v369
        %v371 = vadd.f32 %v365, %v370
        %v372 = vadd.f32 %v366, %v370
        %373 = vadd.xlane.f32.xlu0 %v371
        %v374 = vpop.xlane.xlu0 %373
        %375 = vadd.xlane.f32.xlu0 %v372
        %v376 = vpop.xlane.xlu0 %375
        %v377 = vmul.f32 %v374, 0.03125
        %v378 = vmul.f32 %v376, 0.03125
        %v379 = vmul.f32 %v371, %v371
        %v380 = vmul.f32 %v372, %v372
        %381 = vadd.xlane.f32.xlu0 %v379
        %v382 = vpop.xlane.xlu0 %381
        %383 = vadd.xlane.f32.xlu0 %v380
        %v384 = vpop.xlane.xlu0 %383
        %v385 = vmul.f32 %v382, 0.03125
        %v386 = vmul.f32 %v384, 0.03125
        %v387 = vmul.f32 %v377, %v377
        %v388 = vmul.f32 %v378, %v378
        %v389 = vsub.f32 %v385, %v387
        %v390 = vsub.f32 %v386, %v388
        %v391 = vsub.f32 %v371, %v377
        %v392 = vsub.f32 %v372, %v378
        %v393 = vadd.f32 %v389, 1e-06
        %v394 = vadd.f32 %v390, 1e-06
        %v395 = vrsqrt.pop %v393
        %v396 = vrsqrt.pop %v394
        %v397 = vmul.f32 %v391, %v395
        %v398 = vmul.f32 %v392, %v396
        %v399 = vlaneseq
        %v400 = vshrl.u32 %v399, 7
        %v401 = vsub.s32 0, %v400
        %v402 = vrot.slane %v289, %v401
        %v403 = vmul.f32 %v397, %v402
        %v404 = vmul.f32 %v398, %v402
        %v405 = vlaneseq
        %v406 = vshrl.u32 %v405, 7
        %v407 = vsub.s32 1, %v406
        %v408 = vrot.slane %v289, %v407
        %v409 = vadd.f32 %v403, %v408
        %v410 = vadd.f32 %v404, %v408
        %v411 = vpack.c.bf16 %v410, %v409
        %v412 = vld [vmem:[#allocation8] sm:$0xf]
        %v413 = vld [vmem:[#allocation8 + $0x4] sm:$0xf]
        %v414 = vld [vmem:[#allocation8 + $0x8] sm:$0xf]
        %v415 = vld [vmem:[#allocation8 + $0xc] sm:$0xf]
        %v416 = vld [vmem:[#allocation8 + $0x10] sm:$0xf]
        %v417 = vld [vmem:[#allocation8 + $0x14] sm:$0xf]
        %v418 = vld [vmem:[#allocation8 + $0x18] sm:$0xf]
        %v419 = vld [vmem:[#allocation8 + $0x1c] sm:$0xf]
        %v420 = vld [vmem:[#allocation8 + $0x20] sm:$0xf]
        %v421 = vld [vmem:[#allocation8 + $0x24] sm:$0xf]
        %v422 = vld [vmem:[#allocation8 + $0x28] sm:$0xf]
        %v423 = vld [vmem:[#allocation8 + $0x2c] sm:$0xf]
        %v424 = vld [vmem:[#allocation8 + $0x30] sm:$0xf]
        %v425 = vld [vmem:[#allocation8 + $0x34] sm:$0xf]
        %v426 = vld [vmem:[#allocation8 + $0x38] sm:$0xf]
        %v427 = vld [vmem:[#allocation8 + $0x3c] sm:$0xf]
        %v428 = vlaneseq
        %v429 = vshrl.u32 %v428, 7
        %v430 = vsub.s32 0, %v429
        %v431 = vrot.slane %v290, %v430
        %v448 = vunpack.c.l.b16 %v412
        %v449 = vunpack.c.l.b16 %v413
        %v450 = vunpack.c.l.b16 %v414
        %v451 = vunpack.c.l.b16 %v415
        %v452 = vunpack.c.l.b16 %v416
        %v453 = vunpack.c.l.b16 %v417
        %v454 = vunpack.c.l.b16 %v418
        %v455 = vunpack.c.l.b16 %v419
        %v456 = vunpack.c.l.b16 %v420
        %v457 = vunpack.c.l.b16 %v421
        %v458 = vunpack.c.l.b16 %v422
        %v459 = vunpack.c.l.b16 %v423
        %v460 = vunpack.c.l.b16 %v424
        %v461 = vunpack.c.l.b16 %v425
        %v462 = vunpack.c.l.b16 %v426
        %v463 = vunpack.c.l.b16 %v427
        %v464 = vpack.c.b16 %v449, %v448
        %v465 = vpack.c.b16 %v451, %v450
        %v466 = vpack.c.b16 %v453, %v452
        %v467 = vpack.c.b16 %v455, %v454
        %v468 = vpack.c.b16 %v457, %v456
        %v469 = vpack.c.b16 %v459, %v458
        %v470 = vpack.c.b16 %v461, %v460
        %v471 = vpack.c.b16 %v463, %v462
        %480 = vmatprep.subr.bf16.mxu0 0
        %481 = vmatpush1.bf16.msra.mxu0 %v464
        %482 = vmatprep.subr.bf16.mxu0 0
        %483 = vmatpush1.bf16.msra.mxu0 %v465
        %484 = vmatprep.subr.bf16.mxu0 0
        %485 = vmatpush1.bf16.msra.mxu0 %v466
        %486 = vmatprep.subr.bf16.mxu0 0
        %487 = vmatpush1.bf16.msra.mxu0 %v467
        %488 = vmatprep.subr.bf16.mxu0 0
        %489 = vmatpush1.bf16.msra.mxu0 %v468
        %490 = vmatprep.subr.bf16.mxu0 0
        %491 = vmatpush1.bf16.msra.mxu0 %v469
        %492 = vmatprep.subr.bf16.mxu0 0
        %493 = vmatpush1.bf16.msra.mxu0 %v470
        %494 = vmatprep.subr.bf16.mxu0 0
        %495 = vmatpush1.bf16.msra.mxu0 %v471
        %496 = vmatprep.subr.bf16.mxu0 0
        %497 = vmatpush1.bf16.msra.mxu0 0
        %498 = vmatprep.subr.bf16.mxu0 0
        %499 = vmatpush1.bf16.msra.mxu0 0
        %500 = vmatprep.subr.bf16.mxu0 0
        %501 = vmatpush1.bf16.msra.mxu0 0
        %502 = vmatprep.subr.bf16.mxu0 0
        %503 = vmatpush1.bf16.msra.mxu0 0
        %504 = vmatprep.subr.bf16.mxu0 0
        %505 = vmatpush1.bf16.msra.mxu0 0
        %506 = vmatprep.subr.bf16.mxu0 0
        %507 = vmatpush1.bf16.msra.mxu0 0
        %508 = vmatprep.subr.bf16.mxu0 0
        %509 = vmatpush1.bf16.msra.mxu0 0
        %510 = vmatprep.subr.bf16.mxu0 0
        %511 = vmatpush1.bf16.msra.mxu0 0
        %512 = vmatprep.mubr.bf16.mxu0 0
        %513 = vmatmul.mubr.bf16.gmra.mrb[0].mxu0 %v411
        %v514 = vpop.f32.mrb[0].mxu0
        %v515 = vadd.f32 %v431, %v514
        %v516 = vpop.f32.mrb[0].mxu0
        %v517 = vpop.f32.mrb[0].mxu0
        %v518 = vadd.f32 %v431, %v517
        %v519 = vpop.f32.mrb[0].mxu0
        %520 = vdwg.mxu0
        %v521 = vmul.f32 %v515, 0.5
        %v522 = vmul.f32 %v518, 0.5
        %v523 = vmul.f32 %v515, 0.70710677
        %v524 = vmul.f32 %v518, 0.70710677
        %v525 = verf.f32.pop %v523
        %v526 = verf.f32.pop %v524
        %v527 = vadd.f32 %v525, 1.0
        %v528 = vadd.f32 %v526, 1.0
        %v529 = vmul.f32 %v521, %v527
        %v530 = vmul.f32 %v522, %v528
        %v531 = vmul.f32 %v529, %v529
        %v532 = vmul.f32 %v530, %v530
        %v533 = vadd.f32 %v531, %v532
        %v534 = vrot.slane %v533, 4
        %v535 = vadd.f32 %v533, %v534
        %v536 = vrot.slane %v535, 2
        %v537 = vadd.f32 %v535, %v536
        %v538 = vrot.slane %v537, 1
        %v539 = vadd.f32 %v537, %v538
        %v540 = vrsqrt.pop %v539
        %v541 = vmul.f32 %v539, %v540
        %vm542 = vcmp.eq.f32.partialorder %v539, inf
        %v543 = vsel %vm542, %v539, %v541
        %vm544 = vcmp.eq.f32.partialorder %v539, 0.0
        %v545 = vand.u32 %v539, 2147483648
        %v546 = vsel %vm544, %v545, %v543
        %v547 = vpack.c.bf16 %v530, %v529
        %548 = vadd.xlane.f32.xlu0 %v546
        %v549 = vpop.xlane.xlu0 %548
        %v550 = vmul.f32 %v549, 0.015625
        %v551 = vadd.f32 %v550, 1e-06
        %v552 = vrcp.pop %v551
        %v553 = vmul.f32 %v546, %v552
        %v554 = vmul.f32 %v290, %v553
        %v555 = vadd.f32 %v554, 1.0
        %v556 = vpack.c.bf16 %v555, %v555
        %v557 = vpack.c.bf16 %v290, %v290
        %v559 = vshrl.u32 %v556, 16
        %v560 = vpack.i.b16 %v559, %v559
        %v562 = vlaneseq
        %v563 = vshrl.u32 %v562, 7
        %v564 = vsub.s32 0, %v563
        %v565 = vrot.slane %v560, %v564
        %v566 = vmul.bf16 %v547, %v565
        %v568 = vpack.i.b16 %v557, %v557
        %v570 = vlaneseq
        %v571 = vshrl.u32 %v570, 7
        %v572 = vsub.s32 1, %v571
        %v573 = vrot.slane %v568, %v572
        %v574 = vadd.bf16 %v566, %v573
        %v575 = vld [vmem:[#allocation9] sm:$0xf]
        %v576 = vld [vmem:[#allocation9 + $0x4] sm:$0xf]
        %v577 = vld [vmem:[#allocation9 + $0x8] sm:$0xf]
        %v578 = vld [vmem:[#allocation9 + $0xc] sm:$0xf]
        %v579 = vld [vmem:[#allocation9 + $0x10] sm:$0xf]
        %v580 = vld [vmem:[#allocation9 + $0x14] sm:$0xf]
        %v581 = vld [vmem:[#allocation9 + $0x18] sm:$0xf]
        %v582 = vld [vmem:[#allocation9 + $0x1c] sm:$0xf]
        %v583 = vld [vmem:[#allocation9 + $0x20] sm:$0xf]
        %v584 = vld [vmem:[#allocation9 + $0x24] sm:$0xf]
        %v585 = vld [vmem:[#allocation9 + $0x28] sm:$0xf]
        %v586 = vld [vmem:[#allocation9 + $0x2c] sm:$0xf]
        %v587 = vld [vmem:[#allocation9 + $0x30] sm:$0xf]
        %v588 = vld [vmem:[#allocation9 + $0x34] sm:$0xf]
        %v589 = vld [vmem:[#allocation9 + $0x38] sm:$0xf]
        %v590 = vld [vmem:[#allocation9 + $0x3c] sm:$0xf]
        %v607 = vunpack.c.l.b16 %v575
        %v608 = vunpack.c.l.b16 %v576
        %v609 = vunpack.c.l.b16 %v577
        %v610 = vunpack.c.l.b16 %v578
        %v611 = vunpack.c.l.b16 %v579
        %v612 = vunpack.c.l.b16 %v580
        %v613 = vunpack.c.l.b16 %v581
        %v614 = vunpack.c.l.b16 %v582
        %v615 = vunpack.c.l.b16 %v583
        %v616 = vunpack.c.l.b16 %v584
        %v617 = vunpack.c.l.b16 %v585
        %v618 = vunpack.c.l.b16 %v586
        %v619 = vunpack.c.l.b16 %v587
        %v620 = vunpack.c.l.b16 %v588
        %v621 = vunpack.c.l.b16 %v589
        %v622 = vunpack.c.l.b16 %v590
        %v623 = vpack.c.b16 %v608, %v607
        %v624 = vpack.c.b16 %v610, %v609
        %v625 = vpack.c.b16 %v612, %v611
        %v626 = vpack.c.b16 %v614, %v613
        %v627 = vpack.c.b16 %v616, %v615
        %v628 = vpack.c.b16 %v618, %v617
        %v629 = vpack.c.b16 %v620, %v619
        %v630 = vpack.c.b16 %v622, %v621
        %639 = vmatprep.subr.bf16.mxu0 0
        %640 = vmatpush1.bf16.msra.mxu0 %v623
        %641 = vmatprep.subr.bf16.mxu0 0
        %642 = vmatpush1.bf16.msra.mxu0 %v624
        %643 = vmatprep.subr.bf16.mxu0 0
        %644 = vmatpush1.bf16.msra.mxu0 %v625
        %645 = vmatprep.subr.bf16.mxu0 0
        %646 = vmatpush1.bf16.msra.mxu0 %v626
        %647 = vmatprep.subr.bf16.mxu0 0
        %648 = vmatpush1.bf16.msra.mxu0 %v627
        %649 = vmatprep.subr.bf16.mxu0 0
        %650 = vmatpush1.bf16.msra.mxu0 %v628
        %651 = vmatprep.subr.bf16.mxu0 0
        %652 = vmatpush1.bf16.msra.mxu0 %v629
        %653 = vmatprep.subr.bf16.mxu0 0
        %654 = vmatpush1.bf16.msra.mxu0 %v630
        %655 = vmatprep.subr.bf16.mxu0 0
        %656 = vmatpush1.bf16.msra.mxu0 0
        %657 = vmatprep.subr.bf16.mxu0 0
        %658 = vmatpush1.bf16.msra.mxu0 0
        %659 = vmatprep.subr.bf16.mxu0 0
        %660 = vmatpush1.bf16.msra.mxu0 0
        %661 = vmatprep.subr.bf16.mxu0 0
        %662 = vmatpush1.bf16.msra.mxu0 0
        %663 = vmatprep.subr.bf16.mxu0 0
        %664 = vmatpush1.bf16.msra.mxu0 0
        %665 = vmatprep.subr.bf16.mxu0 0
        %666 = vmatpush1.bf16.msra.mxu0 0
        %667 = vmatprep.subr.bf16.mxu0 0
        %668 = vmatpush1.bf16.msra.mxu0 0
        %669 = vmatprep.subr.bf16.mxu0 0
        %670 = vmatpush1.bf16.msra.mxu0 0
        %671 = vmatprep.mubr.bf16.mxu0 0
        %672 = vmatmul.mubr.bf16.gmra.mrb[0].mxu0 %v574
        %v673 = vpop.f32.mrb[0].mxu0
        %v674 = vadd.f32 0.0, %v673
        %v675 = vpop.f32.mrb[0].mxu0
        %v676 = vpop.f32.mrb[0].mxu0
        %v677 = vadd.f32 0.0, %v676
        %v678 = vpop.f32.mrb[0].mxu0
        %679 = vdwg.mxu0
        %v680 = vlaneseq
        %v681 = vshrl.u32 %v680, 7
        %v682 = vsub.s32 2, %v681
        %v683 = vrot.slane %v289, %v682
        %v684 = vadd.f32 %v674, %v683
        %v685 = vadd.f32 %v677, %v683
        %v686 = vld [vmem:[%s248] sm:$0xff]
        %v687 = vld [vmem:[%s248 + $0x8] sm:$0xff]
        %v688 = vadd.f32 %v684, %v686
        %v689 = vadd.f32 %v685, %v687
        %690 = vst [vmem:[%s286] sm:$0xff] %v688
        %691 = vst [vmem:[%s286 + $0x8] sm:$0xff] %v689
        %s692 = sand.u32 %s142, 1
        %s693 = scalar_lea.sflag [#allocation5], %s692
        %s694 = sand.u32 %s142, 1
        %s695 = smul.addr %s694, 16
        %s696 = scalar_lea.vmem [#allocation11], %s695
        // Predicated region
        $region57: #{tpu_custom_call.1} parent=39 // pred_check
          %p697 = pneg %p152
        $region58: #{tpu_custom_call.1} parent=39 // pred_check_branch
          %699 = sbr.rel (%p697) target = $region60
        $region59: #{tpu_custom_call.1} parent=39 // pred_region
          %s701 = ssub.s32 256, 256
          %702 = vsyncadd %s693, %s701
          %s703 = smul.addr %s24, 2
          %s704 = smul.addr %s703, 128
          %s705 = scalar_lea.hbm %s5, %s704
          %s706 = sshll.u32 %s696, 4
          %s707 = int_to_ptr.vmem [resolvable:$true] %s706
          %712 = dma.vmem_to_hbm [thread:$0]  %s707, 256, %s705, %s693, 128, 128, 8
        $region60: #{tpu_custom_call.1} parent=39 // pred_fallthru
          _
      $region40: #{tpu_custom_call.1} parent=5 // pred_fallthru
        _
      %p713 = scmp.le.s32.totalorder 2, %s19
      // Predicated region
      $region61: #{tpu_custom_call.1} parent=5 // pred_check
        %p714 = pneg %p713
      $region62: #{tpu_custom_call.1} parent=5 // pred_check_branch
        %716 = sbr.rel (%p714) target = $region64
      $region63: #{tpu_custom_call.1} parent=5 // pred_region
        %s717 = ssub.s32 %s19, 2
        // Predicated region
        $region65: #{tpu_custom_call.1} parent=63 // pred_check
          %p718 = pneg %p158
        $region66: #{tpu_custom_call.1} parent=63 // pred_check_branch
          %720 = sbr.rel (%p718) target = $region68
        $region67: #{tpu_custom_call.1} parent=63 // pred_region
          %s721 = sand.u32 %s143, 1
          %s722 = scalar_lea.sflag [#allocation5], %s721
          %s723 = sand.u32 %s143, 1
          %s724 = smul.addr %s723, 16
          %s725 = scalar_lea.vmem [#allocation11], %s724
          %726 = dma.done %s722, 256
        $region68: #{tpu_custom_call.1} parent=63 // pred_fallthru
          _
      $region64: #{tpu_custom_call.1} parent=5 // pred_fallthru
        _
    $region6: #{tpu_custom_call.1} parent=1 // loop_footer
      %s23 = sadd.s32 1, %s19
    $region7: #{tpu_custom_call.1} parent=1 // loop_footer_branch
      %18 = sbr.rel target = $region3
    $region8: #{tpu_custom_call.1} parent=1 // loop_exit
      _
    %727 = vsyncpa [#allocation4], 1
    %s728 = scalar_lea.sflag [#allocation4], 1
    %729 = vsyncpa %s728, 1
    %730 = vsyncpa [#allocation7], 1
    %731 = vsyncpa [#allocation10], 1
    %732 = vsyncpa [#allocation5], 1
    %s733 = scalar_lea.sflag [#allocation5], 1
    %734 = vsyncpa %s733, 1

</llo_original>
